<compile_context>
chip_gen: v7x
topology: tpu7x:2x2x1
jax: 0.10.0
libtpu: 0.0.40
codegen_flags: <defaults>
</compile_context>

<pallas_src>
import functools
import math

import jax
import jax.numpy as jnp
from jax.experimental import pallas as pl
from jax.experimental.pallas import tpu as pltpu


def _round_up(v, m):
    return ((v + m - 1) // m) * m


# ---------------------------------------------------------------------------
# Dense layer: y = x @ W + b, gridded ("parallel") over node tiles.
# ---------------------------------------------------------------------------
def _dense_kernel(x_ref, w_ref, b_ref, o_ref):
    x = x_ref[...].astype(jnp.bfloat16)            # bf16 feed, f32 accumulate
    y = jnp.dot(x, w_ref[...], preferred_element_type=jnp.float32)
    o_ref[...] = y + b_ref[...]


def _dense(x, w, b, *, node_tile):
    n_p, k = x.shape
    m = w.shape[1]
    return pl.pallas_call(
        _dense_kernel,
        out_shape=jax.ShapeDtypeStruct((n_p, m), jnp.float32),
        grid=(n_p // node_tile,),
        in_specs=[
            pl.BlockSpec((node_tile, k), lambda i: (i, 0)),
            pl.BlockSpec((k, m), lambda i: (0, 0)),
            pl.BlockSpec((1, m), lambda i: (0, 0)),
        ],
        out_specs=pl.BlockSpec((node_tile, m), lambda i: (i, 0)),
        compiler_params=pltpu.CompilerParams(
            dimension_semantics=("parallel",)),
    )(x, w, b)


# ---------------------------------------------------------------------------
# Residual hypergraph-conv layers. Grid axis = layer index ("arbitrary").
# The node state h lives in the output VMEM block (constant block index =>
# resident across the whole layer loop, single HBM writeback at the end).
# W_l / b_l / theta_l stream per layer (double-buffered by the pipeline).
# ---------------------------------------------------------------------------
def _gcn_layers_kernel(hnl_ref, hnt_ref, x0_ref, wl_ref, bl_ref, theta_ref,
                       h_ref, *, alpha):
    l = pl.program_id(0)

    @pl.when(l == 0)
    def _():                                       # layer 0 input = x0 = fc_in(x)
        h_ref[...] = x0_ref[...]

    theta = theta_ref[0]                           # [1, hid] pre-broadcast scalar

    h_bf = h_ref[...].astype(jnp.bfloat16)
    # hyperedge messages:  m = Hn^T @ h                         [E, hid]
    m = jnp.dot(hnt_ref[...], h_bf, preferred_element_type=jnp.float32)
    # back to nodes:       agg = Hn @ m  (= P @ h)              [N, hid]
    agg = jnp.dot(hnl_ref[...], m.astype(jnp.bfloat16),
                  preferred_element_type=jnp.float32)

    # GCNII residual + identity-mapped weight (f32 elementwise math)
    s = agg + alpha * (x0_ref[...] - agg)          # (1-a)*agg + a*x0
    sw = jnp.dot(s.astype(jnp.bfloat16), wl_ref[0],
                 preferred_element_type=jnp.float32)
    h_new = s + theta * (sw - s) + bl_ref[0]       # (1-t)*s + t*(sW) + b
    h_ref[...] = jnp.maximum(h_new, 0.0)           # ReLU; dropout p=0 -> no-op


def _gcn_layers(hn_l, hn_rt, x0, w_l, b_l, thetas, *, alpha):
    n_p, e_p = hn_l.shape
    hid_p = x0.shape[1]
    num_layers = w_l.shape[0]

    kernel = functools.partial(_gcn_layers_kernel, alpha=float(alpha))

    # Resident: HnL + HnT (bf16), x0 + h/out (f32).
    # Streamed (double-buffered): per-layer W (bf16), b + theta (f32).
    resident = 2 * n_p * e_p * 2 + 2 * n_p * hid_p * 4
    streamed = 2 * (hid_p * hid_p * 2 + 2 * hid_p * 4)
    vmem_limit = min(max(2 * (resident + streamed), 16 << 20), 64 << 20)

    return pl.pallas_call(
        kernel,
        out_shape=jax.ShapeDtypeStruct((n_p, hid_p), jnp.float32),
        grid=(num_layers,),
        in_specs=[
            pl.BlockSpec((n_p, e_p), lambda l: (0, 0)),            # HnL  (resident)
            pl.BlockSpec((e_p, n_p), lambda l: (0, 0)),            # HnT  (resident)
            pl.BlockSpec((n_p, hid_p), lambda l: (0, 0)),          # x0   (resident)
            pl.BlockSpec((1, hid_p, hid_p), lambda l: (l, 0, 0)),  # W_l  (streamed)
            pl.BlockSpec((1, 1, hid_p), lambda l: (l, 0, 0)),      # b_l  (streamed)
            pl.BlockSpec((1, 1, hid_p), lambda l: (l, 0, 0)),      # theta_l
        ],
        out_specs=pl.BlockSpec((n_p, hid_p), lambda l: (0, 0)),    # resident h
        compiler_params=pltpu.CompilerParams(
            dimension_semantics=("arbitrary",),
            vmem_limit_bytes=vmem_limit),
    )(hn_l, hn_rt, x0, w_l, b_l, thetas)


# ---------------------------------------------------------------------------
# Full forward.
# ---------------------------------------------------------------------------
def hyper_resid_gcn_forward(x, H, params, *, num_layers, alpha, beta,
                            symmetric_norm=True, node_tile=128):
    f32, bf16 = jnp.float32, jnp.bfloat16

    n, din = x.shape
    e = H.shape[1]
    hid = params["w_in"].shape[1]
    dout = params["w_out"].shape[1]

    n_p = _round_up(n, node_tile)
    e_p = _round_up(e, 128)
    din_p = _round_up(din, 128)
    hid_p = _round_up(hid, 128)
    dout_p = _round_up(dout, 128)

    # ---- lane-dense zero padding (exact: padded rows/cols stay decoupled) ---
    x_p = jnp.pad(x.astype(f32), ((0, n_p - n), (0, din_p - din)))
    H_p = jnp.pad(H.astype(f32), ((0, n_p - n), (0, e_p - e)))

    w_in = jnp.pad(params["w_in"].astype(f32),
                   ((0, din_p - din), (0, hid_p - hid))).astype(bf16)
    b_in = jnp.pad(params["b_in"].astype(f32), ((0, 0), (0, hid_p - hid)))
    w_l = jnp.pad(params["w_layers"].astype(f32),
                  ((0, 0), (0, hid_p - hid), (0, hid_p - hid))).astype(bf16)
    b_l = jnp.pad(params["b_layers"].astype(f32),
                  ((0, 0), (0, 0), (0, hid_p - hid)))
    w_out = jnp.pad(params["w_out"].astype(f32),
                    ((0, hid_p - hid), (0, dout_p - dout))).astype(bf16)
    b_out = jnp.pad(params["b_out"].astype(f32), ((0, 0), (0, dout_p - dout)))

    # ---- one-time hoisted hypergraph normalization (wrapper-side) -----------
    # symmetric : P = (Dv^-1/2 H De^-1/2) (Dv^-1/2 H De^-1/2)^T = HnL @ HnR^T
    # asymmetric: P = (Dv^-1   H De^-1/2) (        H De^-1/2)^T
    dv = jnp.sum(H_p, axis=1, keepdims=True)            # node degrees [N, 1]
    de = jnp.sum(H_p, axis=0, keepdims=True)            # edge degrees [1, E]
    de_isqrt = jnp.where(de > 0.0, jax.lax.rsqrt(jnp.maximum(de, 1e-12)), 0.0)
    if symmetric_norm:
        dv_left = jnp.where(dv > 0.0, jax.lax.rsqrt(jnp.maximum(dv, 1e-12)), 0.0)
        dv_right = dv_left
    else:
        dv_left = jnp.where(dv > 0.0, 1.0 / jnp.maximum(dv, 1e-12), 0.0)
        dv_right = jnp.ones_like(dv)
    hn_l = ((dv_left * H_p) * de_isqrt).astype(bf16)          # [N, E]
    hn_rt = ((dv_right * H_p) * de_isqrt).T.astype(bf16)      # [E, N] pre-transposed

    # identity-mapping strengths, computed host-side (static Python floats),
    # pre-broadcast to a lane-dense [L, 1, hid] slab so they stream like b_l.
    theta_vals = jnp.asarray(
        [math.log(beta / (l + 1) + 1.0) for l in range(num_layers)], dtype=f32)
    thetas = jnp.broadcast_to(theta_vals[:, None, None],
                              (num_layers, 1, hid_p)).astype(f32)

    # ---- fc_in ---------------------------------------------------------------
    x0 = _dense(x_p.astype(bf16), w_in, b_in, node_tile=node_tile)   # [N, hid] f32

    # ---- residual hypergraph conv layers -------------------------------------
    h_final = _gcn_layers(hn_l, hn_rt, x0, w_l, b_l, thetas, alpha=alpha)

    # ---- fc_out ---------------------------------------------------------------
    y_p = _dense(h_final, w_out, b_out, node_tile=node_tile)

    return y_p[:n, :dout]


# ---------------------------------------------------------------------------
# Pure-JAX reference (f32) for validation.
# ---------------------------------------------------------------------------
def hyper_resid_gcn_reference(x, H, params, *, num_layers, alpha, beta,
                              symmetric_norm=True):
    x = x.astype(jnp.float32)
    H = H.astype(jnp.float32)
    dv = jnp.sum(H, axis=1, keepdims=True)
    de = jnp.sum(H, axis=0, keepdims=True)
    de_isqrt = jnp.where(de > 0.0, jax.lax.rsqrt(jnp.maximum(de, 1e-12)), 0.0)
    if symmetric_norm:
        dv_left = jnp.where(dv > 0.0, jax.lax.rsqrt(jnp.maximum(dv, 1e-12)), 0.0)
        dv_right = dv_left
    else:
        dv_left = jnp.where(dv > 0.0, 1.0 / jnp.maximum(dv, 1e-12), 0.0)
        dv_right = jnp.ones_like(dv)
    hn_l = (dv_left * H) * de_isqrt
    hn_r = (dv_right * H) * de_isqrt

    h = x @ params["w_in"] + params["b_in"]
    x0 = h
    for l in range(num_layers):
        theta = math.log(beta / (l + 1) + 1.0)
        agg = hn_l @ (hn_r.T @ h)
        s = (1.0 - alpha) * agg + alpha * x0
        h = (1.0 - theta) * s + theta * (s @ params["w_layers"][l]) \
            + params["b_layers"][l]
        h = jnp.maximum(h, 0.0)
    return h @ params["w_out"] + params["b_out"]


def init_params(key, input_dim, hidden_dim, output_dim, num_layers):
    ks = jax.random.split(key, 6)
    scale = 0.1
    return {
        "w_in": scale * jax.random.normal(ks[0], (input_dim, hidden_dim), jnp.float32),
        "b_in": scale * jax.random.normal(ks[1], (1, hidden_dim), jnp.float32),
        "w_layers": scale * jax.random.normal(
            ks[2], (num_layers, hidden_dim, hidden_dim), jnp.float32),
        "b_layers": scale * jax.random.normal(
            ks[3], (num_layers, 1, hidden_dim), jnp.float32),
        "w_out": scale * jax.random.normal(ks[4], (hidden_dim, output_dim), jnp.float32),
        "b_out": scale * jax.random.normal(ks[5], (1, output_dim), jnp.float32),
    }


if __name__ == "__main__":
    num_nodes = 64
    num_edges = 32
    input_dim = 16
    hidden_dim = 32
    output_dim = 8
    num_layers = 2
    alpha = 0.1
    beta = 0.5

    key = jax.random.PRNGKey(0)
    kx, kh, kp = jax.random.split(key, 3)

    x = jax.random.normal(kx, (num_nodes, input_dim), jnp.float32)
    H = jax.random.bernoulli(kh, 0.3, (num_nodes, num_edges)).astype(jnp.float32)
    params = init_params(kp, input_dim, hidden_dim, output_dim, num_layers)

    fwd = jax.jit(functools.partial(
        hyper_resid_gcn_forward,
        num_layers=num_layers, alpha=alpha, beta=beta, symmetric_norm=True))

    y = fwd(x, H, params)
    y = jax.block_until_ready(y)

    assert y.shape == (num_nodes, output_dim)
    assert jnp.all(jnp.isfinite(y))

    y_ref = hyper_resid_gcn_reference(
        x, H, params,
        num_layers=num_layers, alpha=alpha, beta=beta, symmetric_norm=True,
    )
    max_err = float(jnp.max(jnp.abs(y - y_ref)))
    assert max_err < 5e-2, f"max abs error vs f32 reference too large: {max_err}"

    print("KERNEL_OK")
</pallas_src>

<mosaic_0001>
module attributes {stable_mosaic.version = 11 : i64} {
  func.func @_dense_kernel(%arg0: i32, %arg1: memref<128x128xbf16, #tpu.memory_space<vmem>>, %arg2: memref<128x128xbf16, #tpu.memory_space<vmem>>, %arg3: memref<1x128xf32, #tpu.memory_space<vmem>>, %arg4: memref<128x128xf32, #tpu.memory_space<vmem>>) attributes {dimension_semantics = [#tpu.dimension_semantics<parallel>], iteration_bounds = array<i64: 1>, scalar_prefetch = 0 : i64, scratch_operands = 0 : i64, tpu.core_type = #tpu.core_type<tc>, window_params = [{transform_indices = @transform_0, window_bounds = array<i64: 128, 128>}, {pipeline_mode = #tpu.pipeline_mode<synchronous>, transform_indices = @transform_1, window_bounds = array<i64: 128, 128>}, {pipeline_mode = #tpu.pipeline_mode<synchronous>, transform_indices = @transform_2, window_bounds = array<i64: 1, 128>}, {transform_indices = @transform_3, window_bounds = array<i64: 128, 128>}]} {
    %c0 = arith.constant 0 : index
    %c0_0 = arith.constant 0 : index
    %0 = vector.load %arg1[%c0, %c0_0] : memref<128x128xbf16, #tpu.memory_space<vmem>>, vector<128x128xbf16>
    %c0_1 = arith.constant 0 : index
    %c0_2 = arith.constant 0 : index
    %1 = vector.load %arg2[%c0_1, %c0_2] : memref<128x128xbf16, #tpu.memory_space<vmem>>, vector<128x128xbf16>
    %cst = arith.constant dense<0.000000e+00> : vector<128x128xf32>
    %2 = tpu.matmul %0, %1, %cst {dimension_numbers = #tpu.dot_dimension_numbers<[1], [0], [0], [1], [0, 0, 1, 1], [], []>} : vector<128x128xbf16>, vector<128x128xbf16>, vector<128x128xf32> -> vector<128x128xf32>
    %c0_3 = arith.constant 0 : index
    %c0_4 = arith.constant 0 : index
    %3 = vector.load %arg3[%c0_3, %c0_4] : memref<1x128xf32, #tpu.memory_space<vmem>>, vector<1x128xf32>
    %4 = vector.broadcast %3 : vector<1x128xf32> to vector<128x128xf32>
    %5 = arith.addf %2, %4 : vector<128x128xf32>
    %c0_5 = arith.constant 0 : index
    %c0_6 = arith.constant 0 : index
    %6 = vector.load %arg4[%c0_5, %c0_6] : memref<128x128xf32, #tpu.memory_space<vmem>>, vector<128x128xf32>
    tpu.vector_store %arg4[%c0_5, %c0_6], %5 {strides = array<i32>} : memref<128x128xf32, #tpu.memory_space<vmem>>, vector<128x128xf32>,
    return
  }
  func.func @transform_0(%arg0: i32) -> (i32, i32) {
    %c0_i32 = arith.constant 0 : i32
    %c0_i32_0 = arith.constant 0 : i32
    return %arg0, %c0_i32 : i32, i32
  }
  func.func @transform_1(%arg0: i32) -> (i32, i32) {
    %c0_i32 = arith.constant 0 : i32
    %c0_i32_0 = arith.constant 0 : i32
    %c0_i32_1 = arith.constant 0 : i32
    return %c0_i32, %c0_i32_0 : i32, i32
  }
  func.func @transform_2(%arg0: i32) -> (i32, i32) {
    %c0_i32 = arith.constant 0 : i32
    %c0_i32_0 = arith.constant 0 : i32
    %c0_i32_1 = arith.constant 0 : i32
    return %c0_i32, %c0_i32_0 : i32, i32
  }
  func.func @transform_3(%arg0: i32) -> (i32, i32) {
    %c0_i32 = arith.constant 0 : i32
    %c0_i32_0 = arith.constant 0 : i32
    return %arg0, %c0_i32 : i32, i32
  }
}

module attributes {stable_mosaic.version = 11 : i64} {
  func.func @_gcn_layers_kernel(%arg0: i32, %arg1: memref<128x128xbf16, #tpu.memory_space<vmem>>, %arg2: memref<128x128xbf16, #tpu.memory_space<vmem>>, %arg3: memref<128x128xf32, #tpu.memory_space<vmem>>, %arg4: memref<1x128x128xbf16, #tpu.memory_space<vmem>>, %arg5: memref<1x1x128xf32, #tpu.memory_space<vmem>>, %arg6: memref<1x1x128xf32, #tpu.memory_space<vmem>>, %arg7: memref<128x128xf32, #tpu.memory_space<vmem>>) attributes {dimension_semantics = [#tpu.dimension_semantics<arbitrary>], iteration_bounds = array<i64: 2>, scalar_prefetch = 0 : i64, scratch_operands = 0 : i64, tpu.core_type = #tpu.core_type<tc>, window_params = [{pipeline_mode = #tpu.pipeline_mode<synchronous>, transform_indices = @transform_0, window_bounds = array<i64: 128, 128>}, {pipeline_mode = #tpu.pipeline_mode<synchronous>, transform_indices = @transform_1, window_bounds = array<i64: 128, 128>}, {pipeline_mode = #tpu.pipeline_mode<synchronous>, transform_indices = @transform_2, window_bounds = array<i64: 128, 128>}, {transform_indices = @transform_3, window_bounds = array<i64: 1, 128, 128>}, {transform_indices = @transform_4, window_bounds = array<i64: 1, 1, 128>}, {transform_indices = @transform_5, window_bounds = array<i64: 1, 1, 128>}, {pipeline_mode = #tpu.pipeline_mode<synchronous>, transform_indices = @transform_6, window_bounds = array<i64: 128, 128>}]} {
    %c0_i32 = arith.constant 0 : i32
    %0 = arith.cmpi eq, %arg0, %c0_i32 : i32
    %1 = arith.extui %0 : i1 to i32
    %c0_i32_0 = arith.constant 0 : i32
    %2 = arith.cmpi ne, %1, %c0_i32_0 : i32
    scf.if %2 {
      %c0_23 = arith.constant 0 : index
      %c0_24 = arith.constant 0 : index
      %32 = vector.load %arg3[%c0_23, %c0_24] : memref<128x128xf32, #tpu.memory_space<vmem>>, vector<128x128xf32>
      %c0_25 = arith.constant 0 : index
      %c0_26 = arith.constant 0 : index
      %33 = vector.load %arg7[%c0_25, %c0_26] : memref<128x128xf32, #tpu.memory_space<vmem>>, vector<128x128xf32>
      tpu.vector_store %arg7[%c0_25, %c0_26], %32 {strides = array<i32>} : memref<128x128xf32, #tpu.memory_space<vmem>>, vector<128x128xf32>,
    } else {
    }
    %c0 = arith.constant 0 : index
    %c0_1 = arith.constant 0 : index
    %c0_2 = arith.constant 0 : index
    %3 = vector.load %arg6[%c0, %c0_1, %c0_2] : memref<1x1x128xf32, #tpu.memory_space<vmem>>, vector<1x1x128xf32>
    %4 = vector.shape_cast %3 : vector<1x1x128xf32> to vector<1x128xf32>
    %c0_3 = arith.constant 0 : index
    %c0_4 = arith.constant 0 : index
    %5 = vector.load %arg7[%c0_3, %c0_4] : memref<128x128xf32, #tpu.memory_space<vmem>>, vector<128x128xf32>
    %6 = arith.truncf %5 : vector<128x128xf32> to vector<128x128xbf16>
    %c0_5 = arith.constant 0 : index
    %c0_6 = arith.constant 0 : index
    %7 = vector.load %arg2[%c0_5, %c0_6] : memref<128x128xbf16, #tpu.memory_space<vmem>>, vector<128x128xbf16>
    %cst = arith.constant dense<0.000000e+00> : vector<128x128xf32>
    %8 = tpu.matmul %7, %6, %cst {dimension_numbers = #tpu.dot_dimension_numbers<[1], [0], [0], [1], [0, 0, 1, 1], [], []>} : vector<128x128xbf16>, vector<128x128xbf16>, vector<128x128xf32> -> vector<128x128xf32>
    %c0_7 = arith.constant 0 : index
    %c0_8 = arith.constant 0 : index
    %9 = vector.load %arg1[%c0_7, %c0_8] : memref<128x128xbf16, #tpu.memory_space<vmem>>, vector<128x128xbf16>
    %10 = arith.truncf %8 : vector<128x128xf32> to vector<128x128xbf16>
    %cst_9 = arith.constant dense<0.000000e+00> : vector<128x128xf32>
    %11 = tpu.matmul %9, %10, %cst_9 {dimension_numbers = #tpu.dot_dimension_numbers<[1], [0], [0], [1], [0, 0, 1, 1], [], []>} : vector<128x128xbf16>, vector<128x128xbf16>, vector<128x128xf32> -> vector<128x128xf32>
    %c0_10 = arith.constant 0 : index
    %c0_11 = arith.constant 0 : index
    %12 = vector.load %arg3[%c0_10, %c0_11] : memref<128x128xf32, #tpu.memory_space<vmem>>, vector<128x128xf32>
    %13 = arith.subf %12, %11 : vector<128x128xf32>
    %cst_12 = arith.constant 1.000000e-01 : f32
    %14 = vector.broadcast %cst_12 : f32 to vector<128x128xf32>
    %15 = arith.mulf %14, %13 : vector<128x128xf32>
    %16 = arith.addf %11, %15 : vector<128x128xf32>
    %17 = arith.truncf %16 : vector<128x128xf32> to vector<128x128xbf16>
    %c0_13 = arith.constant 0 : index
    %c0_14 = arith.constant 0 : index
    %c0_15 = arith.constant 0 : index
    %18 = vector.load %arg4[%c0_13, %c0_14, %c0_15] : memref<1x128x128xbf16, #tpu.memory_space<vmem>>, vector<1x128x128xbf16>
    %19 = vector.shape_cast %18 : vector<1x128x128xbf16> to vector<128x128xbf16>
    %cst_16 = arith.constant dense<0.000000e+00> : vector<128x128xf32>
    %20 = tpu.matmul %17, %19, %cst_16 {dimension_numbers = #tpu.dot_dimension_numbers<[1], [0], [0], [1], [0, 0, 1, 1], [], []>} : vector<128x128xbf16>, vector<128x128xbf16>, vector<128x128xf32> -> vector<128x128xf32>
    %21 = arith.subf %20, %16 : vector<128x128xf32>
    %22 = vector.broadcast %4 : vector<1x128xf32> to vector<128x128xf32>
    %23 = arith.mulf %22, %21 : vector<128x128xf32>
    %24 = arith.addf %16, %23 : vector<128x128xf32>
    %c0_17 = arith.constant 0 : index
    %c0_18 = arith.constant 0 : index
    %c0_19 = arith.constant 0 : index
    %25 = vector.load %arg5[%c0_17, %c0_18, %c0_19] : memref<1x1x128xf32, #tpu.memory_space<vmem>>, vector<1x1x128xf32>
    %26 = vector.shape_cast %25 : vector<1x1x128xf32> to vector<1x128xf32>
    %27 = vector.broadcast %26 : vector<1x128xf32> to vector<128x128xf32>
    %28 = arith.addf %24, %27 : vector<128x128xf32>
    %cst_20 = arith.constant 0.000000e+00 : f32
    %29 = vector.broadcast %cst_20 : f32 to vector<128x128xf32>
    %30 = arith.maximumf %28, %29 : vector<128x128xf32>
    %c0_21 = arith.constant 0 : index
    %c0_22 = arith.constant 0 : index
    %31 = vector.load %arg7[%c0_21, %c0_22] : memref<128x128xf32, #tpu.memory_space<vmem>>, vector<128x128xf32>
    tpu.vector_store %arg7[%c0_21, %c0_22], %30 {strides = array<i32>} : memref<128x128xf32, #tpu.memory_space<vmem>>, vector<128x128xf32>,
    return
  }
  func.func @transform_0(%arg0: i32) -> (i32, i32) {
    %c0_i32 = arith.constant 0 : i32
    %c0_i32_0 = arith.constant 0 : i32
    %c0_i32_1 = arith.constant 0 : i32
    return %c0_i32, %c0_i32_0 : i32, i32
  }
  func.func @transform_1(%arg0: i32) -> (i32, i32) {
    %c0_i32 = arith.constant 0 : i32
    %c0_i32_0 = arith.constant 0 : i32
    %c0_i32_1 = arith.constant 0 : i32
    return %c0_i32, %c0_i32_0 : i32, i32
  }
  func.func @transform_2(%arg0: i32) -> (i32, i32) {
    %c0_i32 = arith.constant 0 : i32
    %c0_i32_0 = arith.constant 0 : i32
    %c0_i32_1 = arith.constant 0 : i32
    return %c0_i32, %c0_i32_0 : i32, i32
  }
  func.func @transform_3(%arg0: i32) -> (i32, i32, i32) {
    %c0_i32 = arith.constant 0 : i32
    %c0_i32_0 = arith.constant 0 : i32
    %c0_i32_1 = arith.constant 0 : i32
    return %arg0, %c0_i32, %c0_i32_0 : i32, i32, i32
  }
  func.func @transform_4(%arg0: i32) -> (i32, i32, i32) {
    %c0_i32 = arith.constant 0 : i32
    %c0_i32_0 = arith.constant 0 : i32
    %c0_i32_1 = arith.constant 0 : i32
    return %arg0, %c0_i32, %c0_i32_0 : i32, i32, i32
  }
  func.func @transform_5(%arg0: i32) -> (i32, i32, i32) {
    %c0_i32 = arith.constant 0 : i32
    %c0_i32_0 = arith.constant 0 : i32
    %c0_i32_1 = arith.constant 0 : i32
    return %arg0, %c0_i32, %c0_i32_0 : i32, i32, i32
  }
  func.func @transform_6(%arg0: i32) -> (i32, i32) {
    %c0_i32 = arith.constant 0 : i32
    %c0_i32_0 = arith.constant 0 : i32
    %c0_i32_1 = arith.constant 0 : i32
    return %c0_i32, %c0_i32_0 : i32, i32
  }
}

module attributes {stable_mosaic.version = 11 : i64} {
  func.func @_dense_kernel(%arg0: i32, %arg1: memref<128x128xf32, #tpu.memory_space<vmem>>, %arg2: memref<128x128xbf16, #tpu.memory_space<vmem>>, %arg3: memref<1x128xf32, #tpu.memory_space<vmem>>, %arg4: memref<128x128xf32, #tpu.memory_space<vmem>>) attributes {dimension_semantics = [#tpu.dimension_semantics<parallel>], iteration_bounds = array<i64: 1>, scalar_prefetch = 0 : i64, scratch_operands = 0 : i64, tpu.core_type = #tpu.core_type<tc>, window_params = [{transform_indices = @transform_0, window_bounds = array<i64: 128, 128>}, {pipeline_mode = #tpu.pipeline_mode<synchronous>, transform_indices = @transform_1, window_bounds = array<i64: 128, 128>}, {pipeline_mode = #tpu.pipeline_mode<synchronous>, transform_indices = @transform_2, window_bounds = array<i64: 1, 128>}, {transform_indices = @transform_3, window_bounds = array<i64: 128, 128>}]} {
    %c0 = arith.constant 0 : index
    %c0_0 = arith.constant 0 : index
    %0 = vector.load %arg1[%c0, %c0_0] : memref<128x128xf32, #tpu.memory_space<vmem>>, vector<128x128xf32>
    %1 = arith.truncf %0 : vector<128x128xf32> to vector<128x128xbf16>
    %c0_1 = arith.constant 0 : index
    %c0_2 = arith.constant 0 : index
    %2 = vector.load %arg2[%c0_1, %c0_2] : memref<128x128xbf16, #tpu.memory_space<vmem>>, vector<128x128xbf16>
    %cst = arith.constant dense<0.000000e+00> : vector<128x128xf32>
    %3 = tpu.matmul %1, %2, %cst {dimension_numbers = #tpu.dot_dimension_numbers<[1], [0], [0], [1], [0, 0, 1, 1], [], []>} : vector<128x128xbf16>, vector<128x128xbf16>, vector<128x128xf32> -> vector<128x128xf32>
    %c0_3 = arith.constant 0 : index
    %c0_4 = arith.constant 0 : index
    %4 = vector.load %arg3[%c0_3, %c0_4] : memref<1x128xf32, #tpu.memory_space<vmem>>, vector<1x128xf32>
    %5 = vector.broadcast %4 : vector<1x128xf32> to vector<128x128xf32>
    %6 = arith.addf %3, %5 : vector<128x128xf32>
    %c0_5 = arith.constant 0 : index
    %c0_6 = arith.constant 0 : index
    %7 = vector.load %arg4[%c0_5, %c0_6] : memref<128x128xf32, #tpu.memory_space<vmem>>, vector<128x128xf32>
    tpu.vector_store %arg4[%c0_5, %c0_6], %6 {strides = array<i32>} : memref<128x128xf32, #tpu.memory_space<vmem>>, vector<128x128xf32>,
    return
  }
  func.func @transform_0(%arg0: i32) -> (i32, i32) {
    %c0_i32 = arith.constant 0 : i32
    %c0_i32_0 = arith.constant 0 : i32
    return %arg0, %c0_i32 : i32, i32
  }
  func.func @transform_1(%arg0: i32) -> (i32, i32) {
    %c0_i32 = arith.constant 0 : i32
    %c0_i32_0 = arith.constant 0 : i32
    %c0_i32_1 = arith.constant 0 : i32
    return %c0_i32, %c0_i32_0 : i32, i32
  }
  func.func @transform_2(%arg0: i32) -> (i32, i32) {
    %c0_i32 = arith.constant 0 : i32
    %c0_i32_0 = arith.constant 0 : i32
    %c0_i32_1 = arith.constant 0 : i32
    return %c0_i32, %c0_i32_0 : i32, i32
  }
  func.func @transform_3(%arg0: i32) -> (i32, i32) {
    %c0_i32 = arith.constant 0 : i32
    %c0_i32_0 = arith.constant 0 : i32
    return %arg0, %c0_i32 : i32, i32
  }
}

</mosaic_0001>

<llo_original>
// kernel: hyper_resid_gcn_forward.3
$region0: #{hyper_resid_gcn_forward.3}
  #allocation0 [shape = 'u32[]', space=smem, size = 0x4, offset = 0x4, fixed_abs, tag = 'smem constant byte address 0x4 - core index']
  #allocation1 [shape = 'u32[144,128]{1,0:T(1,128)}', space=vmem, size = 0x12000, scoped, tag = 'internal scratch']
  %s0 = inlined_call_operand.vmem [shape: bf16[128,128], index: 0, kind: input, shape index: {}]
  %s1 = inlined_call_operand.vmem [shape: bf16[128,128], index: 1, kind: input, shape index: {}]
  %s2 = inlined_call_operand.vmem [shape: f32[1,128], index: 2, kind: input, shape index: {}]
  %s3 = inlined_call_operand.vmem [shape: f32[128,128], index: 3, kind: output, shape index: {}]
  %s4 = sld [smem:[#allocation0]]
  $region22: #{hyper_resid_gcn_forward.3} parent=0
    _
  %s6 = ssub.s32 1, %s4
  %s7 = scalar_select 0, %s6, %s4
  // Predicated region
  $region2: #{hyper_resid_gcn_forward.3} parent=0 // pred_check
    _
  $region3: #{hyper_resid_gcn_forward.3} parent=0 // pred_check_branch
    %9 = sbr.rel (0) target = $region5
  $region4: #{hyper_resid_gcn_forward.3} parent=0 // pred_region
    _
  $region5: #{hyper_resid_gcn_forward.3} parent=0 // pred_fallthru
    _
  // Predicated region
  $region6: #{hyper_resid_gcn_forward.3} parent=0 // pred_check
    _
  $region7: #{hyper_resid_gcn_forward.3} parent=0 // pred_check_branch
    %11 = sbr.rel (0) target = $region9
  $region8: #{hyper_resid_gcn_forward.3} parent=0 // pred_region
    _
  $region9: #{hyper_resid_gcn_forward.3} parent=0 // pred_fallthru
    _
  // Predicated region
  $region10: #{hyper_resid_gcn_forward.3} parent=0 // pred_check
    _
  $region11: #{hyper_resid_gcn_forward.3} parent=0 // pred_check_branch
    %13 = sbr.rel (0) target = $region13
  $region12: #{hyper_resid_gcn_forward.3} parent=0 // pred_region
    _
  $region13: #{hyper_resid_gcn_forward.3} parent=0 // pred_fallthru
    _
  %v15 = vld [vmem:[%s0] sm:$0xf]
  %v16 = vld [vmem:[%s0 + $0x4] sm:$0xf]
  %v17 = vld [vmem:[%s0 + $0x8] sm:$0xf]
  %v18 = vld [vmem:[%s0 + $0xc] sm:$0xf]
  %v19 = vld [vmem:[%s0 + $0x10] sm:$0xf]
  %v20 = vld [vmem:[%s0 + $0x14] sm:$0xf]
  %v21 = vld [vmem:[%s0 + $0x18] sm:$0xf]
  %v22 = vld [vmem:[%s0 + $0x1c] sm:$0xf]
  %v23 = vld [vmem:[%s0 + $0x20] sm:$0xf]
  %v24 = vld [vmem:[%s0 + $0x24] sm:$0xf]
  %v25 = vld [vmem:[%s0 + $0x28] sm:$0xf]
  %v26 = vld [vmem:[%s0 + $0x2c] sm:$0xf]
  %v27 = vld [vmem:[%s0 + $0x30] sm:$0xf]
  %v28 = vld [vmem:[%s0 + $0x34] sm:$0xf]
  %v29 = vld [vmem:[%s0 + $0x38] sm:$0xf]
  %v30 = vld [vmem:[%s0 + $0x3c] sm:$0xf]
  %v31 = vld [vmem:[%s1] sm:$0xf]
  %v32 = vld [vmem:[%s1 + $0x4] sm:$0xf]
  %v33 = vld [vmem:[%s1 + $0x8] sm:$0xf]
  %v34 = vld [vmem:[%s1 + $0xc] sm:$0xf]
  %v35 = vld [vmem:[%s1 + $0x10] sm:$0xf]
  %v36 = vld [vmem:[%s1 + $0x14] sm:$0xf]
  %v37 = vld [vmem:[%s1 + $0x18] sm:$0xf]
  %v38 = vld [vmem:[%s1 + $0x1c] sm:$0xf]
  %v39 = vld [vmem:[%s1 + $0x20] sm:$0xf]
  %v40 = vld [vmem:[%s1 + $0x24] sm:$0xf]
  %v41 = vld [vmem:[%s1 + $0x28] sm:$0xf]
  %v42 = vld [vmem:[%s1 + $0x2c] sm:$0xf]
  %v43 = vld [vmem:[%s1 + $0x30] sm:$0xf]
  %v44 = vld [vmem:[%s1 + $0x34] sm:$0xf]
  %v45 = vld [vmem:[%s1 + $0x38] sm:$0xf]
  %v46 = vld [vmem:[%s1 + $0x3c] sm:$0xf]
  %v47 = vld [vmem:[%s2] sm:$0x1]
  %v49 = vlaneseq
  %v50 = vshrl.u32 %v49, 7
  %v51 = vsub.s32 0, %v50
  %v52 = vrot.slane %v47, %v51
  %v70 = vunpack.c.l.b16 %v15
  %v71 = vunpack.c.l.b16 %v16
  %v72 = vunpack.c.l.b16 %v17
  %v73 = vunpack.c.l.b16 %v18
  %v74 = vunpack.c.l.b16 %v19
  %v75 = vunpack.c.l.b16 %v20
  %v76 = vunpack.c.l.b16 %v21
  %v77 = vunpack.c.l.b16 %v22
  %v78 = vunpack.c.l.b16 %v23
  %v79 = vunpack.c.l.b16 %v24
  %v80 = vunpack.c.l.b16 %v25
  %v81 = vunpack.c.l.b16 %v26
  %v82 = vunpack.c.l.b16 %v27
  %v83 = vunpack.c.l.b16 %v28
  %v84 = vunpack.c.l.b16 %v29
  %v85 = vunpack.c.l.b16 %v30
  %v86 = vpack.c.b16 %v71, %v70
  %v87 = vpack.c.b16 %v73, %v72
  %v88 = vpack.c.b16 %v75, %v74
  %v89 = vpack.c.b16 %v77, %v76
  %v90 = vpack.c.b16 %v79, %v78
  %v91 = vpack.c.b16 %v81, %v80
  %v92 = vpack.c.b16 %v83, %v82
  %v93 = vpack.c.b16 %v85, %v84
  %v118 = vunpack.c.l.b16 %v31
  %v119 = vunpack.c.l.b16 %v32
  %v120 = vunpack.c.l.b16 %v33
  %v121 = vunpack.c.l.b16 %v34
  %v122 = vunpack.c.l.b16 %v35
  %v123 = vunpack.c.l.b16 %v36
  %v124 = vunpack.c.l.b16 %v37
  %v125 = vunpack.c.l.b16 %v38
  %v126 = vunpack.c.l.b16 %v39
  %v127 = vunpack.c.l.b16 %v40
  %v128 = vunpack.c.l.b16 %v41
  %v129 = vunpack.c.l.b16 %v42
  %v130 = vunpack.c.l.b16 %v43
  %v131 = vunpack.c.l.b16 %v44
  %v132 = vunpack.c.l.b16 %v45
  %v133 = vunpack.c.l.b16 %v46
  %v134 = vpack.c.b16 %v119, %v118
  %v135 = vpack.c.b16 %v121, %v120
  %v136 = vpack.c.b16 %v123, %v122
  %v137 = vpack.c.b16 %v125, %v124
  %v138 = vpack.c.b16 %v127, %v126
  %v139 = vpack.c.b16 %v129, %v128
  %v140 = vpack.c.b16 %v131, %v130
  %v141 = vpack.c.b16 %v133, %v132
  %150 = vmatprep.subr.bf16.mxu0 0
  %151 = vmatpush1.bf16.msra.mxu0 %v134
  %152 = vmatprep.subr.bf16.mxu0 0
  %153 = vmatpush1.bf16.msra.mxu0 %v135
  %154 = vmatprep.subr.bf16.mxu0 0
  %155 = vmatpush1.bf16.msra.mxu0 %v136
  %156 = vmatprep.subr.bf16.mxu0 0
  %157 = vmatpush1.bf16.msra.mxu0 %v137
  %158 = vmatprep.subr.bf16.mxu0 0
  %159 = vmatpush1.bf16.msra.mxu0 %v138
  %160 = vmatprep.subr.bf16.mxu0 0
  %161 = vmatpush1.bf16.msra.mxu0 %v139
  %162 = vmatprep.subr.bf16.mxu0 0
  %163 = vmatpush1.bf16.msra.mxu0 %v140
  %164 = vmatprep.subr.bf16.mxu0 0
  %165 = vmatpush1.bf16.msra.mxu0 %v141
  %166 = vmatprep.subr.bf16.mxu0 0
  %167 = vmatpush1.bf16.msra.mxu0 0
  %168 = vmatprep.subr.bf16.mxu0 0
  %169 = vmatpush1.bf16.msra.mxu0 0
  %170 = vmatprep.subr.bf16.mxu0 0
  %171 = vmatpush1.bf16.msra.mxu0 0
  %172 = vmatprep.subr.bf16.mxu0 0
  %173 = vmatpush1.bf16.msra.mxu0 0
  %174 = vmatprep.subr.bf16.mxu0 0
  %175 = vmatpush1.bf16.msra.mxu0 0
  %176 = vmatprep.subr.bf16.mxu0 0
  %177 = vmatpush1.bf16.msra.mxu0 0
  %178 = vmatprep.subr.bf16.mxu0 0
  %179 = vmatpush1.bf16.msra.mxu0 0
  %180 = vmatprep.subr.bf16.mxu0 0
  %181 = vmatpush1.bf16.msra.mxu0 0
  %182 = vmatprep.mubr.bf16.mxu0 0
  %183 = vmatmul.mubr.bf16.gmra.mrb[0].mxu0 %v86
  %v184 = vpop.f32.mrb[0].mxu0
  %v185 = vadd.f32 %v52, %v184
  %v186 = vpop.f32.mrb[0].mxu0
  %v187 = vpop.f32.mrb[0].mxu0
  %v188 = vadd.f32 %v52, %v187
  %v189 = vpop.f32.mrb[0].mxu0
  %190 = vmatprep.mubr.bf16.mxu0 0
  %191 = vmatmul.mubr.bf16.gmra.mrb[0].mxu0 %v87
  %v192 = vpop.f32.mrb[0].mxu0
  %v193 = vadd.f32 %v52, %v192
  %v194 = vpop.f32.mrb[0].mxu0
  %v195 = vpop.f32.mrb[0].mxu0
  %v196 = vadd.f32 %v52, %v195
  %v197 = vpop.f32.mrb[0].mxu0
  %198 = vmatprep.mubr.bf16.mxu0 0
  %199 = vmatmul.mubr.bf16.gmra.mrb[0].mxu0 %v88
  %v200 = vpop.f32.mrb[0].mxu0
  %v201 = vadd.f32 %v52, %v200
  %v202 = vpop.f32.mrb[0].mxu0
  %v203 = vpop.f32.mrb[0].mxu0
  %v204 = vadd.f32 %v52, %v203
  %v205 = vpop.f32.mrb[0].mxu0
  %206 = vmatprep.mubr.bf16.mxu0 0
  %207 = vmatmul.mubr.bf16.gmra.mrb[0].mxu0 %v89
  %v208 = vpop.f32.mrb[0].mxu0
  %v209 = vadd.f32 %v52, %v208
  %v210 = vpop.f32.mrb[0].mxu0
  %v211 = vpop.f32.mrb[0].mxu0
  %v212 = vadd.f32 %v52, %v211
  %v213 = vpop.f32.mrb[0].mxu0
  %214 = vmatprep.mubr.bf16.mxu0 0
  %215 = vmatmul.mubr.bf16.gmra.mrb[0].mxu0 %v90
  %v216 = vpop.f32.mrb[0].mxu0
  %v217 = vadd.f32 %v52, %v216
  %v218 = vpop.f32.mrb[0].mxu0
  %v219 = vpop.f32.mrb[0].mxu0
  %v220 = vadd.f32 %v52, %v219
  %v221 = vpop.f32.mrb[0].mxu0
  %222 = vmatprep.mubr.bf16.mxu0 0
  %223 = vmatmul.mubr.bf16.gmra.mrb[0].mxu0 %v91
  %v224 = vpop.f32.mrb[0].mxu0
  %v225 = vadd.f32 %v52, %v224
  %v226 = vpop.f32.mrb[0].mxu0
  %v227 = vpop.f32.mrb[0].mxu0
  %v228 = vadd.f32 %v52, %v227
  %v229 = vpop.f32.mrb[0].mxu0
  %230 = vmatprep.mubr.bf16.mxu0 0
  %231 = vmatmul.mubr.bf16.gmra.mrb[0].mxu0 %v92
  %v232 = vpop.f32.mrb[0].mxu0
  %v233 = vadd.f32 %v52, %v232
  %v234 = vpop.f32.mrb[0].mxu0
  %v235 = vpop.f32.mrb[0].mxu0
  %v236 = vadd.f32 %v52, %v235
  %v237 = vpop.f32.mrb[0].mxu0
  %238 = vmatprep.mubr.bf16.mxu0 0
  %239 = vmatmul.mubr.bf16.gmra.mrb[0].mxu0 %v93
  %v240 = vpop.f32.mrb[0].mxu0
  %v241 = vadd.f32 %v52, %v240
  %v242 = vpop.f32.mrb[0].mxu0
  %v243 = vpop.f32.mrb[0].mxu0
  %v244 = vadd.f32 %v52, %v243
  %v245 = vpop.f32.mrb[0].mxu0
  %246 = vdwg.mxu0
  %247 = vst [vmem:[%s3] sm:$0xff] %v185
  %248 = vst [vmem:[%s3 + $0x8] sm:$0xff] %v188
  %249 = vst [vmem:[%s3 + $0x10] sm:$0xff] %v193
  %250 = vst [vmem:[%s3 + $0x18] sm:$0xff] %v196
  %251 = vst [vmem:[%s3 + $0x20] sm:$0xff] %v201
  %252 = vst [vmem:[%s3 + $0x28] sm:$0xff] %v204
  %253 = vst [vmem:[%s3 + $0x30] sm:$0xff] %v209
  %254 = vst [vmem:[%s3 + $0x38] sm:$0xff] %v212
  %255 = vst [vmem:[%s3 + $0x40] sm:$0xff] %v217
  %256 = vst [vmem:[%s3 + $0x48] sm:$0xff] %v220
  %257 = vst [vmem:[%s3 + $0x50] sm:$0xff] %v225
  %258 = vst [vmem:[%s3 + $0x58] sm:$0xff] %v228
  %259 = vst [vmem:[%s3 + $0x60] sm:$0xff] %v233
  %260 = vst [vmem:[%s3 + $0x68] sm:$0xff] %v236
  %261 = vst [vmem:[%s3 + $0x70] sm:$0xff] %v241
  %262 = vst [vmem:[%s3 + $0x78] sm:$0xff] %v244
  // Predicated region
  $region14: #{hyper_resid_gcn_forward.3} parent=0 // pred_check
    _
  $region15: #{hyper_resid_gcn_forward.3} parent=0 // pred_check_branch
    %264 = sbr.rel (0) target = $region17
  $region16: #{hyper_resid_gcn_forward.3} parent=0 // pred_region
    _
  $region17: #{hyper_resid_gcn_forward.3} parent=0 // pred_fallthru
    _
  // Predicated region
  $region18: #{hyper_resid_gcn_forward.3} parent=0 // pred_check
    _
  $region19: #{hyper_resid_gcn_forward.3} parent=0 // pred_check_branch
    %266 = sbr.rel (0) target = $region21
  $region20: #{hyper_resid_gcn_forward.3} parent=0 // pred_region
    _
  $region21: #{hyper_resid_gcn_forward.3} parent=0 // pred_fallthru
    _

// kernel: hyper_resid_gcn_forward.5
$region0: #{hyper_resid_gcn_forward.5}
  #allocation0 [shape = 'u32[]', space=smem, size = 0x4, offset = 0x4, fixed_abs, tag = 'smem constant byte address 0x4 - core index']
  #allocation1 [shape = 'u32[144,128]{1,0:T(1,128)}', space=vmem, size = 0x12000, scoped, tag = 'internal scratch']
  %s0 = inlined_call_operand.vmem [shape: f32[128,128], index: 0, kind: input, shape index: {}]
  %s1 = inlined_call_operand.vmem [shape: bf16[128,128], index: 1, kind: input, shape index: {}]
  %s2 = inlined_call_operand.vmem [shape: f32[1,128], index: 2, kind: input, shape index: {}]
  %s3 = inlined_call_operand.vmem [shape: f32[128,128], index: 3, kind: output, shape index: {}]
  %s4 = sld [smem:[#allocation0]]
  $region22: #{hyper_resid_gcn_forward.5} parent=0
    _
  %s6 = ssub.s32 1, %s4
  %s7 = scalar_select 0, %s6, %s4
  // Predicated region
  $region2: #{hyper_resid_gcn_forward.5} parent=0 // pred_check
    _
  $region3: #{hyper_resid_gcn_forward.5} parent=0 // pred_check_branch
    %9 = sbr.rel (0) target = $region5
  $region4: #{hyper_resid_gcn_forward.5} parent=0 // pred_region
    _
  $region5: #{hyper_resid_gcn_forward.5} parent=0 // pred_fallthru
    _
  // Predicated region
  $region6: #{hyper_resid_gcn_forward.5} parent=0 // pred_check
    _
  $region7: #{hyper_resid_gcn_forward.5} parent=0 // pred_check_branch
    %11 = sbr.rel (0) target = $region9
  $region8: #{hyper_resid_gcn_forward.5} parent=0 // pred_region
    _
  $region9: #{hyper_resid_gcn_forward.5} parent=0 // pred_fallthru
    _
  // Predicated region
  $region10: #{hyper_resid_gcn_forward.5} parent=0 // pred_check
    _
  $region11: #{hyper_resid_gcn_forward.5} parent=0 // pred_check_branch
    %13 = sbr.rel (0) target = $region13
  $region12: #{hyper_resid_gcn_forward.5} parent=0 // pred_region
    _
  $region13: #{hyper_resid_gcn_forward.5} parent=0 // pred_fallthru
    _
  %v15 = vld [vmem:[%s0] sm:$0xff]
  %v16 = vld [vmem:[%s0 + $0x8] sm:$0xff]
  %v17 = vld [vmem:[%s0 + $0x10] sm:$0xff]
  %v18 = vld [vmem:[%s0 + $0x18] sm:$0xff]
  %v19 = vld [vmem:[%s0 + $0x20] sm:$0xff]
  %v20 = vld [vmem:[%s0 + $0x28] sm:$0xff]
  %v21 = vld [vmem:[%s0 + $0x30] sm:$0xff]
  %v22 = vld [vmem:[%s0 + $0x38] sm:$0xff]
  %v23 = vld [vmem:[%s0 + $0x40] sm:$0xff]
  %v24 = vld [vmem:[%s0 + $0x48] sm:$0xff]
  %v25 = vld [vmem:[%s0 + $0x50] sm:$0xff]
  %v26 = vld [vmem:[%s0 + $0x58] sm:$0xff]
  %v27 = vld [vmem:[%s0 + $0x60] sm:$0xff]
  %v28 = vld [vmem:[%s0 + $0x68] sm:$0xff]
  %v29 = vld [vmem:[%s0 + $0x70] sm:$0xff]
  %v30 = vld [vmem:[%s0 + $0x78] sm:$0xff]
  %v31 = vpack.c.bf16 %v16, %v15
  %v32 = vpack.c.bf16 %v18, %v17
  %v33 = vpack.c.bf16 %v20, %v19
  %v34 = vpack.c.bf16 %v22, %v21
  %v35 = vpack.c.bf16 %v24, %v23
  %v36 = vpack.c.bf16 %v26, %v25
  %v37 = vpack.c.bf16 %v28, %v27
  %v38 = vpack.c.bf16 %v30, %v29
  %v39 = vld [vmem:[%s1] sm:$0xf]
  %v40 = vld [vmem:[%s1 + $0x4] sm:$0xf]
  %v41 = vld [vmem:[%s1 + $0x8] sm:$0xf]
  %v42 = vld [vmem:[%s1 + $0xc] sm:$0xf]
  %v43 = vld [vmem:[%s1 + $0x10] sm:$0xf]
  %v44 = vld [vmem:[%s1 + $0x14] sm:$0xf]
  %v45 = vld [vmem:[%s1 + $0x18] sm:$0xf]
  %v46 = vld [vmem:[%s1 + $0x1c] sm:$0xf]
  %v47 = vld [vmem:[%s1 + $0x20] sm:$0xf]
  %v48 = vld [vmem:[%s1 + $0x24] sm:$0xf]
  %v49 = vld [vmem:[%s1 + $0x28] sm:$0xf]
  %v50 = vld [vmem:[%s1 + $0x2c] sm:$0xf]
  %v51 = vld [vmem:[%s1 + $0x30] sm:$0xf]
  %v52 = vld [vmem:[%s1 + $0x34] sm:$0xf]
  %v53 = vld [vmem:[%s1 + $0x38] sm:$0xf]
  %v54 = vld [vmem:[%s1 + $0x3c] sm:$0xf]
  %v55 = vld [vmem:[%s2] sm:$0x1]
  %v57 = vlaneseq
  %v58 = vshrl.u32 %v57, 7
  %v59 = vsub.s32 0, %v58
  %v60 = vrot.slane %v55, %v59
  %v78 = vunpack.c.l.b16 %v39
  %v79 = vunpack.c.l.b16 %v40
  %v80 = vunpack.c.l.b16 %v41
  %v81 = vunpack.c.l.b16 %v42
  %v82 = vunpack.c.l.b16 %v43
  %v83 = vunpack.c.l.b16 %v44
  %v84 = vunpack.c.l.b16 %v45
  %v85 = vunpack.c.l.b16 %v46
  %v86 = vunpack.c.l.b16 %v47
  %v87 = vunpack.c.l.b16 %v48
  %v88 = vunpack.c.l.b16 %v49
  %v89 = vunpack.c.l.b16 %v50
  %v90 = vunpack.c.l.b16 %v51
  %v91 = vunpack.c.l.b16 %v52
  %v92 = vunpack.c.l.b16 %v53
  %v93 = vunpack.c.l.b16 %v54
  %v94 = vpack.c.b16 %v79, %v78
  %v95 = vpack.c.b16 %v81, %v80
  %v96 = vpack.c.b16 %v83, %v82
  %v97 = vpack.c.b16 %v85, %v84
  %v98 = vpack.c.b16 %v87, %v86
  %v99 = vpack.c.b16 %v89, %v88
  %v100 = vpack.c.b16 %v91, %v90
  %v101 = vpack.c.b16 %v93, %v92
  %110 = vmatprep.subr.bf16.mxu0 0
  %111 = vmatpush1.bf16.msra.mxu0 %v94
  %112 = vmatprep.subr.bf16.mxu0 0
  %113 = vmatpush1.bf16.msra.mxu0 %v95
  %114 = vmatprep.subr.bf16.mxu0 0
  %115 = vmatpush1.bf16.msra.mxu0 %v96
  %116 = vmatprep.subr.bf16.mxu0 0
  %117 = vmatpush1.bf16.msra.mxu0 %v97
  %118 = vmatprep.subr.bf16.mxu0 0
  %119 = vmatpush1.bf16.msra.mxu0 %v98
  %120 = vmatprep.subr.bf16.mxu0 0
  %121 = vmatpush1.bf16.msra.mxu0 %v99
  %122 = vmatprep.subr.bf16.mxu0 0
  %123 = vmatpush1.bf16.msra.mxu0 %v100
  %124 = vmatprep.subr.bf16.mxu0 0
  %125 = vmatpush1.bf16.msra.mxu0 %v101
  %126 = vmatprep.subr.bf16.mxu0 0
  %127 = vmatpush1.bf16.msra.mxu0 0
  %128 = vmatprep.subr.bf16.mxu0 0
  %129 = vmatpush1.bf16.msra.mxu0 0
  %130 = vmatprep.subr.bf16.mxu0 0
  %131 = vmatpush1.bf16.msra.mxu0 0
  %132 = vmatprep.subr.bf16.mxu0 0
  %133 = vmatpush1.bf16.msra.mxu0 0
  %134 = vmatprep.subr.bf16.mxu0 0
  %135 = vmatpush1.bf16.msra.mxu0 0
  %136 = vmatprep.subr.bf16.mxu0 0
  %137 = vmatpush1.bf16.msra.mxu0 0
  %138 = vmatprep.subr.bf16.mxu0 0
  %139 = vmatpush1.bf16.msra.mxu0 0
  %140 = vmatprep.subr.bf16.mxu0 0
  %141 = vmatpush1.bf16.msra.mxu0 0
  %142 = vmatprep.mubr.bf16.mxu0 0
  %143 = vmatmul.mubr.bf16.gmra.mrb[0].mxu0 %v31
  %v144 = vpop.f32.mrb[0].mxu0
  %v145 = vadd.f32 %v60, %v144
  %v146 = vpop.f32.mrb[0].mxu0
  %v147 = vpop.f32.mrb[0].mxu0
  %v148 = vadd.f32 %v60, %v147
  %v149 = vpop.f32.mrb[0].mxu0
  %150 = vmatprep.mubr.bf16.mxu0 0
  %151 = vmatmul.mubr.bf16.gmra.mrb[0].mxu0 %v32
  %v152 = vpop.f32.mrb[0].mxu0
  %v153 = vadd.f32 %v60, %v152
  %v154 = vpop.f32.mrb[0].mxu0
  %v155 = vpop.f32.mrb[0].mxu0
  %v156 = vadd.f32 %v60, %v155
  %v157 = vpop.f32.mrb[0].mxu0
  %158 = vmatprep.mubr.bf16.mxu0 0
  %159 = vmatmul.mubr.bf16.gmra.mrb[0].mxu0 %v33
  %v160 = vpop.f32.mrb[0].mxu0
  %v161 = vadd.f32 %v60, %v160
  %v162 = vpop.f32.mrb[0].mxu0
  %v163 = vpop.f32.mrb[0].mxu0
  %v164 = vadd.f32 %v60, %v163
  %v165 = vpop.f32.mrb[0].mxu0
  %166 = vmatprep.mubr.bf16.mxu0 0
  %167 = vmatmul.mubr.bf16.gmra.mrb[0].mxu0 %v34
  %v168 = vpop.f32.mrb[0].mxu0
  %v169 = vadd.f32 %v60, %v168
  %v170 = vpop.f32.mrb[0].mxu0
  %v171 = vpop.f32.mrb[0].mxu0
  %v172 = vadd.f32 %v60, %v171
  %v173 = vpop.f32.mrb[0].mxu0
  %174 = vmatprep.mubr.bf16.mxu0 0
  %175 = vmatmul.mubr.bf16.gmra.mrb[0].mxu0 %v35
  %v176 = vpop.f32.mrb[0].mxu0
  %v177 = vadd.f32 %v60, %v176
  %v178 = vpop.f32.mrb[0].mxu0
  %v179 = vpop.f32.mrb[0].mxu0
  %v180 = vadd.f32 %v60, %v179
  %v181 = vpop.f32.mrb[0].mxu0
  %182 = vmatprep.mubr.bf16.mxu0 0
  %183 = vmatmul.mubr.bf16.gmra.mrb[0].mxu0 %v36
  %v184 = vpop.f32.mrb[0].mxu0
  %v185 = vadd.f32 %v60, %v184
  %v186 = vpop.f32.mrb[0].mxu0
  %v187 = vpop.f32.mrb[0].mxu0
  %v188 = vadd.f32 %v60, %v187
  %v189 = vpop.f32.mrb[0].mxu0
  %190 = vmatprep.mubr.bf16.mxu0 0
  %191 = vmatmul.mubr.bf16.gmra.mrb[0].mxu0 %v37
  %v192 = vpop.f32.mrb[0].mxu0
  %v193 = vadd.f32 %v60, %v192
  %v194 = vpop.f32.mrb[0].mxu0
  %v195 = vpop.f32.mrb[0].mxu0
  %v196 = vadd.f32 %v60, %v195
  %v197 = vpop.f32.mrb[0].mxu0
  %198 = vmatprep.mubr.bf16.mxu0 0
  %199 = vmatmul.mubr.bf16.gmra.mrb[0].mxu0 %v38
  %v200 = vpop.f32.mrb[0].mxu0
  %v201 = vadd.f32 %v60, %v200
  %v202 = vpop.f32.mrb[0].mxu0
  %v203 = vpop.f32.mrb[0].mxu0
  %v204 = vadd.f32 %v60, %v203
  %v205 = vpop.f32.mrb[0].mxu0
  %206 = vdwg.mxu0
  %207 = vst [vmem:[%s3] sm:$0xff] %v145
  %208 = vst [vmem:[%s3 + $0x8] sm:$0xff] %v148
  %209 = vst [vmem:[%s3 + $0x10] sm:$0xff] %v153
  %210 = vst [vmem:[%s3 + $0x18] sm:$0xff] %v156
  %211 = vst [vmem:[%s3 + $0x20] sm:$0xff] %v161
  %212 = vst [vmem:[%s3 + $0x28] sm:$0xff] %v164
  %213 = vst [vmem:[%s3 + $0x30] sm:$0xff] %v169
  %214 = vst [vmem:[%s3 + $0x38] sm:$0xff] %v172
  %215 = vst [vmem:[%s3 + $0x40] sm:$0xff] %v177
  %216 = vst [vmem:[%s3 + $0x48] sm:$0xff] %v180
  %217 = vst [vmem:[%s3 + $0x50] sm:$0xff] %v185
  %218 = vst [vmem:[%s3 + $0x58] sm:$0xff] %v188
  %219 = vst [vmem:[%s3 + $0x60] sm:$0xff] %v193
  %220 = vst [vmem:[%s3 + $0x68] sm:$0xff] %v196
  %221 = vst [vmem:[%s3 + $0x70] sm:$0xff] %v201
  %222 = vst [vmem:[%s3 + $0x78] sm:$0xff] %v204
  // Predicated region
  $region14: #{hyper_resid_gcn_forward.5} parent=0 // pred_check
    _
  $region15: #{hyper_resid_gcn_forward.5} parent=0 // pred_check_branch
    %224 = sbr.rel (0) target = $region17
  $region16: #{hyper_resid_gcn_forward.5} parent=0 // pred_region
    _
  $region17: #{hyper_resid_gcn_forward.5} parent=0 // pred_fallthru
    _
  // Predicated region
  $region18: #{hyper_resid_gcn_forward.5} parent=0 // pred_check
    _
  $region19: #{hyper_resid_gcn_forward.5} parent=0 // pred_check_branch
    %226 = sbr.rel (0) target = $region21
  $region20: #{hyper_resid_gcn_forward.5} parent=0 // pred_region
    _
  $region21: #{hyper_resid_gcn_forward.5} parent=0 // pred_fallthru
    _

// kernel: hyper_resid_gcn_forward.4
$region0: #{hyper_resid_gcn_forward.4}
  #allocation0 [shape = 'u32[]', space=smem, size = 0x4, offset = 0x4, fixed_abs, tag = 'smem constant byte address 0x4 - core index']
  #allocation1 [shape = 'u32[144,128]{1,0:T(1,128)}', space=vmem, size = 0x12000, scoped, tag = 'internal scratch']
  %s0 = inlined_call_operand.vmem [shape: bf16[128,128], index: 0, kind: input, shape index: {}]
  %s1 = inlined_call_operand.vmem [shape: bf16[128,128], index: 1, kind: input, shape index: {}]
  %s2 = inlined_call_operand.vmem [shape: f32[128,128], index: 2, kind: input, shape index: {}]
  %s3 = inlined_call_operand.vmem [shape: bf16[2,128,128], index: 3, kind: input, shape index: {}]
  %s4 = inlined_call_operand.vmem [shape: f32[2,1,128], index: 4, kind: input, shape index: {}]
  %s5 = inlined_call_operand.vmem [shape: f32[2,1,128], index: 5, kind: input, shape index: {}]
  %s6 = inlined_call_operand.vmem [shape: f32[128,128], index: 6, kind: output, shape index: {}]
  %s7 = sld [smem:[#allocation0]]
  $region61: #{hyper_resid_gcn_forward.4} parent=0
    _
  %s9 = ssub.s32 1, %s7
  %s10 = scalar_select 0, %s9, %s7
  loop: start=0, step=1, limit=4
  $region2: #{hyper_resid_gcn_forward.4} parent=0 // loop_pre_header
    _
  $region3: #{hyper_resid_gcn_forward.4} parent=0 // loop_header
    %s12 = sphi 0, %s16
    %p13 = scmp.ge.s32.totalorder %s12, 4
    %s20 = sphi 0, %s20
    %s22 = sphi 0, %s20
    %s23 = sphi 0, %s22
    %s37 = sphi 0, %s23
    %s41 = sphi 0, %s41
    %s43 = sphi 0, %s41
    %s44 = sphi 0, %s43
    %s58 = sphi 0, %s44
    %s62 = sphi 0, %s62
    %s64 = sphi 0, %s62
    %s65 = sphi 0, %s64
    %s79 = sphi 0, %s65
    %s85 = sphi 0, %s87
    %s88 = sphi 0, %s85
    %s89 = sphi 0, %s88
    %s105 = sphi 0, %s89
    %s111 = sphi 0, %s113
    %s114 = sphi 0, %s111
    %s115 = sphi 0, %s114
    %s131 = sphi 0, %s115
    %s137 = sphi 0, %s139
    %s140 = sphi 0, %s137
    %s141 = sphi 0, %s140
    %s157 = sphi 0, %s141
    %s161 = sphi 0, %s161
    %s163 = sphi 0, %s161
    %s164 = sphi 0, %s163
    %s178 = sphi 0, %s164
  $region4: #{hyper_resid_gcn_forward.4} parent=0 // loop_header_branch
    %15 = sbr.rel (%p13) target = $region8
  $region5: #{hyper_resid_gcn_forward.4} parent=0 // loop_body
    %s17 = ssub.s32 %s12, 1
    %s18 = ssub.s32 %s12, 2
    %s19 = sadd.s32 %s12, 1
    %s21 = sadd.s32 %s20, 1
    %p24 = scmp.eq.s32.totalorder %s12, 1
    %p25 = scmp.ne.s32.totalorder %s20, %s22
    %p26 = scmp.eq.s32.totalorder %s12, 0
    %p27 = por %p25, %p26
    %p28 = scmp.ne.s32.totalorder %s20, %s22
    %p29 = scmp.eq.s32.totalorder %s17, 1
    %p30 = por %p28, %p29
    %p31 = scmp.ne.s32.totalorder %s22, %s23
    %p32 = scmp.eq.s32.totalorder %s17, 0
    %p33 = por %p31, %p32
    %p34 = scmp.ne.s32.totalorder %s22, %s23
    %p35 = scmp.eq.s32.totalorder %s18, 1
    %p36 = por %p34, %p35
    %p38 = scmp.ne.s32.totalorder %s23, %s37
    %p39 = scmp.eq.s32.totalorder %s18, 0
    %p40 = por %p38, %p39
    %s42 = sadd.s32 %s41, 1
    %p45 = scmp.eq.s32.totalorder %s12, 1
    %p46 = scmp.ne.s32.totalorder %s41, %s43
    %p47 = scmp.eq.s32.totalorder %s12, 0
    %p48 = por %p46, %p47
    %p49 = scmp.ne.s32.totalorder %s41, %s43
    %p50 = scmp.eq.s32.totalorder %s17, 1
    %p51 = por %p49, %p50
    %p52 = scmp.ne.s32.totalorder %s43, %s44
    %p53 = scmp.eq.s32.totalorder %s17, 0
    %p54 = por %p52, %p53
    %p55 = scmp.ne.s32.totalorder %s43, %s44
    %p56 = scmp.eq.s32.totalorder %s18, 1
    %p57 = por %p55, %p56
    %p59 = scmp.ne.s32.totalorder %s44, %s58
    %p60 = scmp.eq.s32.totalorder %s18, 0
    %p61 = por %p59, %p60
    %s63 = sadd.s32 %s62, 1
    %p66 = scmp.eq.s32.totalorder %s12, 1
    %p67 = scmp.ne.s32.totalorder %s62, %s64
    %p68 = scmp.eq.s32.totalorder %s12, 0
    %p69 = por %p67, %p68
    %p70 = scmp.ne.s32.totalorder %s62, %s64
    %p71 = scmp.eq.s32.totalorder %s17, 1
    %p72 = por %p70, %p71
    %p73 = scmp.ne.s32.totalorder %s64, %s65
    %p74 = scmp.eq.s32.totalorder %s17, 0
    %p75 = por %p73, %p74
    %p76 = scmp.ne.s32.totalorder %s64, %s65
    %p77 = scmp.eq.s32.totalorder %s18, 1
    %p78 = por %p76, %p77
    %p80 = scmp.ne.s32.totalorder %s65, %s79
    %p81 = scmp.eq.s32.totalorder %s18, 0
    %p82 = por %p80, %p81
    %s83 = ssub.s32 %s12, %s19
    %p84 = scmp.eq.s32.totalorder %s83, 0
    %s86 = sadd.s32 %s85, 1
    %s87 = scalar_select %p84, %s85, %s86
    %p90 = pneg %p84
    %p91 = scmp.eq.s32.totalorder %s12, 1
    %p92 = por %p90, %p91
    %p93 = scmp.ne.s32.totalorder %s85, %s88
    %p94 = scmp.eq.s32.totalorder %s12, 0
    %p95 = por %p93, %p94
    %p96 = scmp.ne.s32.totalorder %s85, %s88
    %p97 = scmp.eq.s32.totalorder %s17, 1
    %p98 = por %p96, %p97
    %p99 = scmp.ne.s32.totalorder %s88, %s89
    %p100 = scmp.eq.s32.totalorder %s17, 0
    %p101 = por %p99, %p100
    %p102 = scmp.ne.s32.totalorder %s88, %s89
    %p103 = scmp.eq.s32.totalorder %s18, 1
    %p104 = por %p102, %p103
    %p106 = scmp.ne.s32.totalorder %s89, %s105
    %p107 = scmp.eq.s32.totalorder %s18, 0
    %p108 = por %p106, %p107
    %s109 = ssub.s32 %s12, %s19
    %p110 = scmp.eq.s32.totalorder %s109, 0
    %s112 = sadd.s32 %s111, 1
    %s113 = scalar_select %p110, %s111, %s112
    %p116 = pneg %p110
    %p117 = scmp.eq.s32.totalorder %s12, 1
    %p118 = por %p116, %p117
    %p119 = scmp.ne.s32.totalorder %s111, %s114
    %p120 = scmp.eq.s32.totalorder %s12, 0
    %p121 = por %p119, %p120
    %p122 = scmp.ne.s32.totalorder %s111, %s114
    %p123 = scmp.eq.s32.totalorder %s17, 1
    %p124 = por %p122, %p123
    %p125 = scmp.ne.s32.totalorder %s114, %s115
    %p126 = scmp.eq.s32.totalorder %s17, 0
    %p127 = por %p125, %p126
    %p128 = scmp.ne.s32.totalorder %s114, %s115
    %p129 = scmp.eq.s32.totalorder %s18, 1
    %p130 = por %p128, %p129
    %p132 = scmp.ne.s32.totalorder %s115, %s131
    %p133 = scmp.eq.s32.totalorder %s18, 0
    %p134 = por %p132, %p133
    %s135 = ssub.s32 %s12, %s19
    %p136 = scmp.eq.s32.totalorder %s135, 0
    %s138 = sadd.s32 %s137, 1
    %s139 = scalar_select %p136, %s137, %s138
    %p142 = pneg %p136
    %p143 = scmp.eq.s32.totalorder %s12, 1
    %p144 = por %p142, %p143
    %p145 = scmp.ne.s32.totalorder %s137, %s140
    %p146 = scmp.eq.s32.totalorder %s12, 0
    %p147 = por %p145, %p146
    %p148 = scmp.ne.s32.totalorder %s137, %s140
    %p149 = scmp.eq.s32.totalorder %s17, 1
    %p150 = por %p148, %p149
    %p151 = scmp.ne.s32.totalorder %s140, %s141
    %p152 = scmp.eq.s32.totalorder %s17, 0
    %p153 = por %p151, %p152
    %p154 = scmp.ne.s32.totalorder %s140, %s141
    %p155 = scmp.eq.s32.totalorder %s18, 1
    %p156 = por %p154, %p155
    %p158 = scmp.ne.s32.totalorder %s141, %s157
    %p159 = scmp.eq.s32.totalorder %s18, 0
    %p160 = por %p158, %p159
    %s162 = sadd.s32 %s161, 1
    %p165 = scmp.eq.s32.totalorder %s12, 1
    %p166 = scmp.ne.s32.totalorder %s161, %s163
    %p167 = scmp.eq.s32.totalorder %s12, 0
    %p168 = por %p166, %p167
    %p169 = scmp.ne.s32.totalorder %s161, %s163
    %p170 = scmp.eq.s32.totalorder %s17, 1
    %p171 = por %p169, %p170
    %p172 = scmp.ne.s32.totalorder %s163, %s164
    %p173 = scmp.eq.s32.totalorder %s17, 0
    %p174 = por %p172, %p173
    %p175 = scmp.ne.s32.totalorder %s163, %s164
    %p176 = scmp.eq.s32.totalorder %s18, 1
    %p177 = por %p175, %p176
    %p179 = scmp.ne.s32.totalorder %s164, %s178
    %p180 = scmp.eq.s32.totalorder %s18, 0
    %p181 = por %p179, %p180
    %p182 = scmp.le.s32.totalorder 1, %s12
    %p183 = scmp.lt.s32.totalorder %s12, 3
    %p184 = pnand %p182, %p183
    %p185 = pneg %p184
    // Predicated region
    $region9: #{hyper_resid_gcn_forward.4} parent=5 // pred_check
      _
    $region10: #{hyper_resid_gcn_forward.4} parent=5 // pred_check_branch
      %187 = sbr.rel (%p184) target = $region12
    $region11: #{hyper_resid_gcn_forward.4} parent=5 // pred_region
      %s188 = ssub.s32 %s12, 1
      // Predicated region
      $region13: #{hyper_resid_gcn_forward.4} parent=11 // pred_check
        %p189 = pneg %p33
      $region14: #{hyper_resid_gcn_forward.4} parent=11 // pred_check_branch
        %191 = sbr.rel (%p189) target = $region16
      $region15: #{hyper_resid_gcn_forward.4} parent=11 // pred_region
        _
      $region16: #{hyper_resid_gcn_forward.4} parent=11 // pred_fallthru
        _
      // Predicated region
      $region17: #{hyper_resid_gcn_forward.4} parent=11 // pred_check
        %p192 = pneg %p54
      $region18: #{hyper_resid_gcn_forward.4} parent=11 // pred_check_branch
        %194 = sbr.rel (%p192) target = $region20
      $region19: #{hyper_resid_gcn_forward.4} parent=11 // pred_region
        _
      $region20: #{hyper_resid_gcn_forward.4} parent=11 // pred_fallthru
        _
      // Predicated region
      $region21: #{hyper_resid_gcn_forward.4} parent=11 // pred_check
        %p195 = pneg %p75
      $region22: #{hyper_resid_gcn_forward.4} parent=11 // pred_check_branch
        %197 = sbr.rel (%p195) target = $region24
      $region23: #{hyper_resid_gcn_forward.4} parent=11 // pred_region
        _
      $region24: #{hyper_resid_gcn_forward.4} parent=11 // pred_fallthru
        _
    $region12: #{hyper_resid_gcn_forward.4} parent=5 // pred_fallthru
      _
    %p198 = scmp.lt.s32.totalorder %s12, 2
    // Predicated region
    $region25: #{hyper_resid_gcn_forward.4} parent=5 // pred_check
      %p199 = pneg %p198
    $region26: #{hyper_resid_gcn_forward.4} parent=5 // pred_check_branch
      %201 = sbr.rel (%p199) target = $region28
    $region27: #{hyper_resid_gcn_forward.4} parent=5 // pred_region
      // Predicated region
      $region29: #{hyper_resid_gcn_forward.4} parent=27 // pred_check
        %p202 = pneg %p95
      $region30: #{hyper_resid_gcn_forward.4} parent=27 // pred_check_branch
        %204 = sbr.rel (%p202) target = $region32
      $region31: #{hyper_resid_gcn_forward.4} parent=27 // pred_region
        %p205 = scmp.lt.s32.totalorder %s12, 1
        %s206 = scalar_select %p205, %s12, 1
        %s207 = smul.addr %s206, 16
        %s208 = smul.addr %s207, 4
        %s209 = scalar_lea.vmem %s3, %s208
      $region32: #{hyper_resid_gcn_forward.4} parent=27 // pred_fallthru
        _
      // Predicated region
      $region33: #{hyper_resid_gcn_forward.4} parent=27 // pred_check
        %p210 = pneg %p121
      $region34: #{hyper_resid_gcn_forward.4} parent=27 // pred_check_branch
        %212 = sbr.rel (%p210) target = $region36
      $region35: #{hyper_resid_gcn_forward.4} parent=27 // pred_region
        %p213 = scmp.lt.s32.totalorder %s12, 1
        %s214 = scalar_select %p213, %s12, 1
        %s215 = scalar_lea.vmem %s4, %s214
      $region36: #{hyper_resid_gcn_forward.4} parent=27 // pred_fallthru
        _
      // Predicated region
      $region37: #{hyper_resid_gcn_forward.4} parent=27 // pred_check
        %p216 = pneg %p147
      $region38: #{hyper_resid_gcn_forward.4} parent=27 // pred_check_branch
        %218 = sbr.rel (%p216) target = $region40
      $region39: #{hyper_resid_gcn_forward.4} parent=27 // pred_region
        %p219 = scmp.lt.s32.totalorder %s12, 1
        %s220 = scalar_select %p219, %s12, 1
        %s221 = scalar_lea.vmem %s5, %s220
      $region40: #{hyper_resid_gcn_forward.4} parent=27 // pred_fallthru
        _
    $region28: #{hyper_resid_gcn_forward.4} parent=5 // pred_fallthru
      _
    %p222 = scmp.le.s32.totalorder 1, %s12
    %p223 = scmp.lt.s32.totalorder %s12, 3
    %p224 = pnand %p222, %p223
    %p225 = pneg %p224
    // Predicated region
    $region41: #{hyper_resid_gcn_forward.4} parent=5 // pred_check
      _
    $region42: #{hyper_resid_gcn_forward.4} parent=5 // pred_check_branch
      %227 = sbr.rel (%p224) target = $region44
    $region43: #{hyper_resid_gcn_forward.4} parent=5 // pred_region
      %s228 = ssub.s32 %s12, 1
      %p229 = pneg %p33
      %p230 = pneg %p30
      %p231 = pneg %p54
      %p232 = pneg %p51
      %p233 = pneg %p75
      %p234 = pneg %p72
      %p235 = scmp.lt.s32.totalorder %s17, 1
      %s236 = scalar_select %p235, %s17, 1
      %s237 = smul.addr %s236, 16
      %s238 = smul.addr %s237, 4
      %s239 = scalar_lea.vmem %s3, %s238
      %p240 = pneg %p101
      %p241 = pneg %p98
      %p242 = scmp.lt.s32.totalorder %s17, 1
      %s243 = scalar_select %p242, %s17, 1
      %s244 = scalar_lea.vmem %s4, %s243
      %p245 = pneg %p127
      %p246 = pneg %p124
      %p247 = scmp.lt.s32.totalorder %s17, 1
      %s248 = scalar_select %p247, %s17, 1
      %s249 = scalar_lea.vmem %s5, %s248
      %p250 = pneg %p153
      %p251 = pneg %p150
      %p252 = pneg %p174
      %p253 = pneg %p171
      %p254 = scmp.lt.s32.totalorder %s17, 1
      %s255 = scalar_select %p254, %s17, 1
      %s256 = smul.addr %s255, 16
      %s257 = smul.addr %s256, 4
      %s258 = scalar_lea.vmem %s3, %s257
      %p259 = scmp.lt.s32.totalorder %s17, 1
      %s260 = scalar_select %p259, %s17, 1
      %s261 = scalar_lea.vmem %s4, %s260
      %p262 = scmp.lt.s32.totalorder %s17, 1
      %s263 = scalar_select %p262, %s17, 1
      %s264 = scalar_lea.vmem %s5, %s263
      %p266 = scmp.eq.s32.totalorder %s17, 0
      // Predicated region
      $region45: #{hyper_resid_gcn_forward.4} parent=43 // pred_check
        %p267 = pneg %p266
      $region46: #{hyper_resid_gcn_forward.4} parent=43 // pred_check_branch
        %269 = sbr.rel (%p267) target = $region48
      $region47: #{hyper_resid_gcn_forward.4} parent=43 // pred_region
        %v270 = vld [vmem:[%s2] sm:$0xff]
        %v271 = vld [vmem:[%s2 + $0x8] sm:$0xff]
        %v272 = vld [vmem:[%s2 + $0x10] sm:$0xff]
        %v273 = vld [vmem:[%s2 + $0x18] sm:$0xff]
        %v274 = vld [vmem:[%s2 + $0x20] sm:$0xff]
        %v275 = vld [vmem:[%s2 + $0x28] sm:$0xff]
        %v276 = vld [vmem:[%s2 + $0x30] sm:$0xff]
        %v277 = vld [vmem:[%s2 + $0x38] sm:$0xff]
        %v278 = vld [vmem:[%s2 + $0x40] sm:$0xff]
        %v279 = vld [vmem:[%s2 + $0x48] sm:$0xff]
        %v280 = vld [vmem:[%s2 + $0x50] sm:$0xff]
        %v281 = vld [vmem:[%s2 + $0x58] sm:$0xff]
        %v282 = vld [vmem:[%s2 + $0x60] sm:$0xff]
        %v283 = vld [vmem:[%s2 + $0x68] sm:$0xff]
        %v284 = vld [vmem:[%s2 + $0x70] sm:$0xff]
        %v285 = vld [vmem:[%s2 + $0x78] sm:$0xff]
        %286 = vst [vmem:[%s6] sm:$0xff] %v270
        %287 = vst [vmem:[%s6 + $0x8] sm:$0xff] %v271
        %288 = vst [vmem:[%s6 + $0x10] sm:$0xff] %v272
        %289 = vst [vmem:[%s6 + $0x18] sm:$0xff] %v273
        %290 = vst [vmem:[%s6 + $0x20] sm:$0xff] %v274
        %291 = vst [vmem:[%s6 + $0x28] sm:$0xff] %v275
        %292 = vst [vmem:[%s6 + $0x30] sm:$0xff] %v276
        %293 = vst [vmem:[%s6 + $0x38] sm:$0xff] %v277
        %294 = vst [vmem:[%s6 + $0x40] sm:$0xff] %v278
        %295 = vst [vmem:[%s6 + $0x48] sm:$0xff] %v279
        %296 = vst [vmem:[%s6 + $0x50] sm:$0xff] %v280
        %297 = vst [vmem:[%s6 + $0x58] sm:$0xff] %v281
        %298 = vst [vmem:[%s6 + $0x60] sm:$0xff] %v282
        %299 = vst [vmem:[%s6 + $0x68] sm:$0xff] %v283
        %300 = vst [vmem:[%s6 + $0x70] sm:$0xff] %v284
        %301 = vst [vmem:[%s6 + $0x78] sm:$0xff] %v285
      $region48: #{hyper_resid_gcn_forward.4} parent=43 // pred_fallthru
        _
      %v302 = vld [vmem:[%s264] sm:$0x1]
      %v303 = vld [vmem:[%s6] sm:$0xff]
      %v304 = vld [vmem:[%s6 + $0x8] sm:$0xff]
      %v305 = vld [vmem:[%s6 + $0x10] sm:$0xff]
      %v306 = vld [vmem:[%s6 + $0x18] sm:$0xff]
      %v307 = vld [vmem:[%s6 + $0x20] sm:$0xff]
      %v308 = vld [vmem:[%s6 + $0x28] sm:$0xff]
      %v309 = vld [vmem:[%s6 + $0x30] sm:$0xff]
      %v310 = vld [vmem:[%s6 + $0x38] sm:$0xff]
      %v311 = vld [vmem:[%s6 + $0x40] sm:$0xff]
      %v312 = vld [vmem:[%s6 + $0x48] sm:$0xff]
      %v313 = vld [vmem:[%s6 + $0x50] sm:$0xff]
      %v314 = vld [vmem:[%s6 + $0x58] sm:$0xff]
      %v315 = vld [vmem:[%s6 + $0x60] sm:$0xff]
      %v316 = vld [vmem:[%s6 + $0x68] sm:$0xff]
      %v317 = vld [vmem:[%s6 + $0x70] sm:$0xff]
      %v318 = vld [vmem:[%s6 + $0x78] sm:$0xff]
      %v319 = vpack.c.bf16 %v304, %v303
      %v320 = vpack.c.bf16 %v306, %v305
      %v321 = vpack.c.bf16 %v308, %v307
      %v322 = vpack.c.bf16 %v310, %v309
      %v323 = vpack.c.bf16 %v312, %v311
      %v324 = vpack.c.bf16 %v314, %v313
      %v325 = vpack.c.bf16 %v316, %v315
      %v326 = vpack.c.bf16 %v318, %v317
      %v327 = vld [vmem:[%s1] sm:$0xf]
      %v328 = vld [vmem:[%s1 + $0x4] sm:$0xf]
      %v329 = vld [vmem:[%s1 + $0x8] sm:$0xf]
      %v330 = vld [vmem:[%s1 + $0xc] sm:$0xf]
      %v331 = vld [vmem:[%s1 + $0x10] sm:$0xf]
      %v332 = vld [vmem:[%s1 + $0x14] sm:$0xf]
      %v333 = vld [vmem:[%s1 + $0x18] sm:$0xf]
      %v334 = vld [vmem:[%s1 + $0x1c] sm:$0xf]
      %v335 = vld [vmem:[%s1 + $0x20] sm:$0xf]
      %v336 = vld [vmem:[%s1 + $0x24] sm:$0xf]
      %v337 = vld [vmem:[%s1 + $0x28] sm:$0xf]
      %v338 = vld [vmem:[%s1 + $0x2c] sm:$0xf]
      %v339 = vld [vmem:[%s1 + $0x30] sm:$0xf]
      %v340 = vld [vmem:[%s1 + $0x34] sm:$0xf]
      %v341 = vld [vmem:[%s1 + $0x38] sm:$0xf]
      %v342 = vld [vmem:[%s1 + $0x3c] sm:$0xf]
      %v359 = vunpack.c.l.b16 %v327
      %v360 = vunpack.c.l.b16 %v328
      %v361 = vunpack.c.l.b16 %v329
      %v362 = vunpack.c.l.b16 %v330
      %v363 = vunpack.c.l.b16 %v331
      %v364 = vunpack.c.l.b16 %v332
      %v365 = vunpack.c.l.b16 %v333
      %v366 = vunpack.c.l.b16 %v334
      %v367 = vunpack.c.l.b16 %v335
      %v368 = vunpack.c.l.b16 %v336
      %v369 = vunpack.c.l.b16 %v337
      %v370 = vunpack.c.l.b16 %v338
      %v371 = vunpack.c.l.b16 %v339
      %v372 = vunpack.c.l.b16 %v340
      %v373 = vunpack.c.l.b16 %v341
      %v374 = vunpack.c.l.b16 %v342
      %v375 = vpack.c.b16 %v360, %v359
      %v376 = vpack.c.b16 %v362, %v361
      %v377 = vpack.c.b16 %v364, %v363
      %v378 = vpack.c.b16 %v366, %v365
      %v379 = vpack.c.b16 %v368, %v367
      %v380 = vpack.c.b16 %v370, %v369
      %v381 = vpack.c.b16 %v372, %v371
      %v382 = vpack.c.b16 %v374, %v373
      %391 = vmatprep.subr.bf16.mxu0 0
      %392 = vmatpush1.bf16.msra.mxu0 %v319
      %393 = vmatprep.subr.bf16.mxu0 0
      %394 = vmatpush1.bf16.msra.mxu0 %v320
      %395 = vmatprep.subr.bf16.mxu0 0
      %396 = vmatpush1.bf16.msra.mxu0 %v321
      %397 = vmatprep.subr.bf16.mxu0 0
      %398 = vmatpush1.bf16.msra.mxu0 %v322
      %399 = vmatprep.subr.bf16.mxu0 0
      %400 = vmatpush1.bf16.msra.mxu0 %v323
      %401 = vmatprep.subr.bf16.mxu0 0
      %402 = vmatpush1.bf16.msra.mxu0 %v324
      %403 = vmatprep.subr.bf16.mxu0 0
      %404 = vmatpush1.bf16.msra.mxu0 %v325
      %405 = vmatprep.subr.bf16.mxu0 0
      %406 = vmatpush1.bf16.msra.mxu0 %v326
      %407 = vmatprep.subr.bf16.mxu0 0
      %408 = vmatpush1.bf16.msra.mxu0 0
      %409 = vmatprep.subr.bf16.mxu0 0
      %410 = vmatpush1.bf16.msra.mxu0 0
      %411 = vmatprep.subr.bf16.mxu0 0
      %412 = vmatpush1.bf16.msra.mxu0 0
      %413 = vmatprep.subr.bf16.mxu0 0
      %414 = vmatpush1.bf16.msra.mxu0 0
      %415 = vmatprep.subr.bf16.mxu0 0
      %416 = vmatpush1.bf16.msra.mxu0 0
      %417 = vmatprep.subr.bf16.mxu0 0
      %418 = vmatpush1.bf16.msra.mxu0 0
      %419 = vmatprep.subr.bf16.mxu0 0
      %420 = vmatpush1.bf16.msra.mxu0 0
      %421 = vmatprep.subr.bf16.mxu0 0
      %422 = vmatpush1.bf16.msra.mxu0 0
      %423 = vmatprep.mubr.bf16.mxu0 0
      %424 = vmatmul.mubr.bf16.gmra.mrb[0].mxu0 %v375
      %v425 = vpop.f32.mrb[0].mxu0
      %v426 = vadd.f32 0.0, %v425
      %v427 = vpop.f32.mrb[0].mxu0
      %v428 = vpop.f32.mrb[0].mxu0
      %v429 = vadd.f32 0.0, %v428
      %v430 = vpop.f32.mrb[0].mxu0
      %431 = vmatprep.mubr.bf16.mxu0 0
      %432 = vmatmul.mubr.bf16.gmra.mrb[0].mxu0 %v376
      %v433 = vpop.f32.mrb[0].mxu0
      %v434 = vadd.f32 0.0, %v433
      %v435 = vpop.f32.mrb[0].mxu0
      %v436 = vpop.f32.mrb[0].mxu0
      %v437 = vadd.f32 0.0, %v436
      %v438 = vpop.f32.mrb[0].mxu0
      %439 = vmatprep.mubr.bf16.mxu0 0
      %440 = vmatmul.mubr.bf16.gmra.mrb[0].mxu0 %v377
      %v441 = vpop.f32.mrb[0].mxu0
      %v442 = vadd.f32 0.0, %v441
      %v443 = vpop.f32.mrb[0].mxu0
      %v444 = vpop.f32.mrb[0].mxu0
      %v445 = vadd.f32 0.0, %v444
      %v446 = vpop.f32.mrb[0].mxu0
      %447 = vmatprep.mubr.bf16.mxu0 0
      %448 = vmatmul.mubr.bf16.gmra.mrb[0].mxu0 %v378
      %v449 = vpop.f32.mrb[0].mxu0
      %v450 = vadd.f32 0.0, %v449
      %v451 = vpop.f32.mrb[0].mxu0
      %v452 = vpop.f32.mrb[0].mxu0
      %v453 = vadd.f32 0.0, %v452
      %v454 = vpop.f32.mrb[0].mxu0
      %455 = vmatprep.mubr.bf16.mxu0 0
      %456 = vmatmul.mubr.bf16.gmra.mrb[0].mxu0 %v379
      %v457 = vpop.f32.mrb[0].mxu0
      %v458 = vadd.f32 0.0, %v457
      %v459 = vpop.f32.mrb[0].mxu0
      %v460 = vpop.f32.mrb[0].mxu0
      %v461 = vadd.f32 0.0, %v460
      %v462 = vpop.f32.mrb[0].mxu0
      %463 = vmatprep.mubr.bf16.mxu0 0
      %464 = vmatmul.mubr.bf16.gmra.mrb[0].mxu0 %v380
      %v465 = vpop.f32.mrb[0].mxu0
      %v466 = vadd.f32 0.0, %v465
      %v467 = vpop.f32.mrb[0].mxu0
      %v468 = vpop.f32.mrb[0].mxu0
      %v469 = vadd.f32 0.0, %v468
      %v470 = vpop.f32.mrb[0].mxu0
      %471 = vmatprep.mubr.bf16.mxu0 0
      %472 = vmatmul.mubr.bf16.gmra.mrb[0].mxu0 %v381
      %v473 = vpop.f32.mrb[0].mxu0
      %v474 = vadd.f32 0.0, %v473
      %v475 = vpop.f32.mrb[0].mxu0
      %v476 = vpop.f32.mrb[0].mxu0
      %v477 = vadd.f32 0.0, %v476
      %v478 = vpop.f32.mrb[0].mxu0
      %479 = vmatprep.mubr.bf16.mxu0 0
      %480 = vmatmul.mubr.bf16.gmra.mrb[0].mxu0 %v382
      %v481 = vpop.f32.mrb[0].mxu0
      %v482 = vadd.f32 0.0, %v481
      %v483 = vpop.f32.mrb[0].mxu0
      %v484 = vpop.f32.mrb[0].mxu0
      %v485 = vadd.f32 0.0, %v484
      %v486 = vpop.f32.mrb[0].mxu0
      %487 = vdwg.mxu0
      %v488 = vld [vmem:[%s0] sm:$0xf]
      %v489 = vld [vmem:[%s0 + $0x4] sm:$0xf]
      %v490 = vld [vmem:[%s0 + $0x8] sm:$0xf]
      %v491 = vld [vmem:[%s0 + $0xc] sm:$0xf]
      %v492 = vld [vmem:[%s0 + $0x10] sm:$0xf]
      %v493 = vld [vmem:[%s0 + $0x14] sm:$0xf]
      %v494 = vld [vmem:[%s0 + $0x18] sm:$0xf]
      %v495 = vld [vmem:[%s0 + $0x1c] sm:$0xf]
      %v496 = vld [vmem:[%s0 + $0x20] sm:$0xf]
      %v497 = vld [vmem:[%s0 + $0x24] sm:$0xf]
      %v498 = vld [vmem:[%s0 + $0x28] sm:$0xf]
      %v499 = vld [vmem:[%s0 + $0x2c] sm:$0xf]
      %v500 = vld [vmem:[%s0 + $0x30] sm:$0xf]
      %v501 = vld [vmem:[%s0 + $0x34] sm:$0xf]
      %v502 = vld [vmem:[%s0 + $0x38] sm:$0xf]
      %v503 = vld [vmem:[%s0 + $0x3c] sm:$0xf]
      %v504 = vpack.c.bf16 %v429, %v426
      %v505 = vpack.c.bf16 %v437, %v434
      %v506 = vpack.c.bf16 %v445, %v442
      %v507 = vpack.c.bf16 %v453, %v450
      %v508 = vpack.c.bf16 %v461, %v458
      %v509 = vpack.c.bf16 %v469, %v466
      %v510 = vpack.c.bf16 %v477, %v474
      %v511 = vpack.c.bf16 %v485, %v482
      %v528 = vunpack.c.l.b16 %v488
      %v529 = vunpack.c.l.b16 %v489
      %v530 = vunpack.c.l.b16 %v490
      %v531 = vunpack.c.l.b16 %v491
      %v532 = vunpack.c.l.b16 %v492
      %v533 = vunpack.c.l.b16 %v493
      %v534 = vunpack.c.l.b16 %v494
      %v535 = vunpack.c.l.b16 %v495
      %v536 = vunpack.c.l.b16 %v496
      %v537 = vunpack.c.l.b16 %v497
      %v538 = vunpack.c.l.b16 %v498
      %v539 = vunpack.c.l.b16 %v499
      %v540 = vunpack.c.l.b16 %v500
      %v541 = vunpack.c.l.b16 %v501
      %v542 = vunpack.c.l.b16 %v502
      %v543 = vunpack.c.l.b16 %v503
      %v544 = vpack.c.b16 %v529, %v528
      %v545 = vpack.c.b16 %v531, %v530
      %v546 = vpack.c.b16 %v533, %v532
      %v547 = vpack.c.b16 %v535, %v534
      %v548 = vpack.c.b16 %v537, %v536
      %v549 = vpack.c.b16 %v539, %v538
      %v550 = vpack.c.b16 %v541, %v540
      %v551 = vpack.c.b16 %v543, %v542
      %560 = vmatprep.subr.bf16.mxu0 0
      %561 = vmatpush1.bf16.msra.mxu0 %v504
      %562 = vmatprep.subr.bf16.mxu0 0
      %563 = vmatpush1.bf16.msra.mxu0 %v505
      %564 = vmatprep.subr.bf16.mxu0 0
      %565 = vmatpush1.bf16.msra.mxu0 %v506
      %566 = vmatprep.subr.bf16.mxu0 0
      %567 = vmatpush1.bf16.msra.mxu0 %v507
      %568 = vmatprep.subr.bf16.mxu0 0
      %569 = vmatpush1.bf16.msra.mxu0 %v508
      %570 = vmatprep.subr.bf16.mxu0 0
      %571 = vmatpush1.bf16.msra.mxu0 %v509
      %572 = vmatprep.subr.bf16.mxu0 0
      %573 = vmatpush1.bf16.msra.mxu0 %v510
      %574 = vmatprep.subr.bf16.mxu0 0
      %575 = vmatpush1.bf16.msra.mxu0 %v511
      %576 = vmatprep.subr.bf16.mxu0 0
      %577 = vmatpush1.bf16.msra.mxu0 0
      %578 = vmatprep.subr.bf16.mxu0 0
      %579 = vmatpush1.bf16.msra.mxu0 0
      %580 = vmatprep.subr.bf16.mxu0 0
      %581 = vmatpush1.bf16.msra.mxu0 0
      %582 = vmatprep.subr.bf16.mxu0 0
      %583 = vmatpush1.bf16.msra.mxu0 0
      %584 = vmatprep.subr.bf16.mxu0 0
      %585 = vmatpush1.bf16.msra.mxu0 0
      %586 = vmatprep.subr.bf16.mxu0 0
      %587 = vmatpush1.bf16.msra.mxu0 0
      %588 = vmatprep.subr.bf16.mxu0 0
      %589 = vmatpush1.bf16.msra.mxu0 0
      %590 = vmatprep.subr.bf16.mxu0 0
      %591 = vmatpush1.bf16.msra.mxu0 0
      %592 = vmatprep.mubr.bf16.mxu0 0
      %593 = vmatmul.mubr.bf16.gmra.mrb[0].mxu0 %v544
      %v594 = vpop.f32.mrb[0].mxu0
      %v595 = vadd.f32 0.0, %v594
      %v596 = vpop.f32.mrb[0].mxu0
      %v597 = vpop.f32.mrb[0].mxu0
      %v598 = vadd.f32 0.0, %v597
      %v599 = vpop.f32.mrb[0].mxu0
      %600 = vmatprep.mubr.bf16.mxu0 0
      %601 = vmatmul.mubr.bf16.gmra.mrb[0].mxu0 %v545
      %v602 = vpop.f32.mrb[0].mxu0
      %v603 = vadd.f32 0.0, %v602
      %v604 = vpop.f32.mrb[0].mxu0
      %v605 = vpop.f32.mrb[0].mxu0
      %v606 = vadd.f32 0.0, %v605
      %v607 = vpop.f32.mrb[0].mxu0
      %608 = vmatprep.mubr.bf16.mxu0 0
      %609 = vmatmul.mubr.bf16.gmra.mrb[0].mxu0 %v546
      %v610 = vpop.f32.mrb[0].mxu0
      %v611 = vadd.f32 0.0, %v610
      %v612 = vpop.f32.mrb[0].mxu0
      %v613 = vpop.f32.mrb[0].mxu0
      %v614 = vadd.f32 0.0, %v613
      %v615 = vpop.f32.mrb[0].mxu0
      %616 = vmatprep.mubr.bf16.mxu0 0
      %617 = vmatmul.mubr.bf16.gmra.mrb[0].mxu0 %v547
      %v618 = vpop.f32.mrb[0].mxu0
      %v619 = vadd.f32 0.0, %v618
      %v620 = vpop.f32.mrb[0].mxu0
      %v621 = vpop.f32.mrb[0].mxu0
      %v622 = vadd.f32 0.0, %v621
      %v623 = vpop.f32.mrb[0].mxu0
      %624 = vmatprep.mubr.bf16.mxu0 0
      %625 = vmatmul.mubr.bf16.gmra.mrb[0].mxu0 %v548
      %v626 = vpop.f32.mrb[0].mxu0
      %v627 = vadd.f32 0.0, %v626
      %v628 = vpop.f32.mrb[0].mxu0
      %v629 = vpop.f32.mrb[0].mxu0
      %v630 = vadd.f32 0.0, %v629
      %v631 = vpop.f32.mrb[0].mxu0
      %632 = vmatprep.mubr.bf16.mxu0 0
      %633 = vmatmul.mubr.bf16.gmra.mrb[0].mxu0 %v549
      %v634 = vpop.f32.mrb[0].mxu0
      %v635 = vadd.f32 0.0, %v634
      %v636 = vpop.f32.mrb[0].mxu0
      %v637 = vpop.f32.mrb[0].mxu0
      %v638 = vadd.f32 0.0, %v637
      %v639 = vpop.f32.mrb[0].mxu0
      %640 = vmatprep.mubr.bf16.mxu0 0
      %641 = vmatmul.mubr.bf16.gmra.mrb[0].mxu0 %v550
      %v642 = vpop.f32.mrb[0].mxu0
      %v643 = vadd.f32 0.0, %v642
      %v644 = vpop.f32.mrb[0].mxu0
      %v645 = vpop.f32.mrb[0].mxu0
      %v646 = vadd.f32 0.0, %v645
      %v647 = vpop.f32.mrb[0].mxu0
      %648 = vmatprep.mubr.bf16.mxu0 0
      %649 = vmatmul.mubr.bf16.gmra.mrb[0].mxu0 %v551
      %v650 = vpop.f32.mrb[0].mxu0
      %v651 = vadd.f32 0.0, %v650
      %v652 = vpop.f32.mrb[0].mxu0
      %v653 = vpop.f32.mrb[0].mxu0
      %v654 = vadd.f32 0.0, %v653
      %v655 = vpop.f32.mrb[0].mxu0
      %656 = vdwg.mxu0
      %v657 = vld [vmem:[%s2] sm:$0xff]
      %v658 = vld [vmem:[%s2 + $0x8] sm:$0xff]
      %v659 = vld [vmem:[%s2 + $0x10] sm:$0xff]
      %v660 = vld [vmem:[%s2 + $0x18] sm:$0xff]
      %v661 = vld [vmem:[%s2 + $0x20] sm:$0xff]
      %v662 = vld [vmem:[%s2 + $0x28] sm:$0xff]
      %v663 = vld [vmem:[%s2 + $0x30] sm:$0xff]
      %v664 = vld [vmem:[%s2 + $0x38] sm:$0xff]
      %v665 = vld [vmem:[%s2 + $0x40] sm:$0xff]
      %v666 = vld [vmem:[%s2 + $0x48] sm:$0xff]
      %v667 = vld [vmem:[%s2 + $0x50] sm:$0xff]
      %v668 = vld [vmem:[%s2 + $0x58] sm:$0xff]
      %v669 = vld [vmem:[%s2 + $0x60] sm:$0xff]
      %v670 = vld [vmem:[%s2 + $0x68] sm:$0xff]
      %v671 = vld [vmem:[%s2 + $0x70] sm:$0xff]
      %v672 = vld [vmem:[%s2 + $0x78] sm:$0xff]
      %v673 = vsub.f32 %v657, %v595
      %v674 = vsub.f32 %v658, %v598
      %v675 = vsub.f32 %v659, %v603
      %v676 = vsub.f32 %v660, %v606
      %v677 = vsub.f32 %v661, %v611
      %v678 = vsub.f32 %v662, %v614
      %v679 = vsub.f32 %v663, %v619
      %v680 = vsub.f32 %v664, %v622
      %v681 = vsub.f32 %v665, %v627
      %v682 = vsub.f32 %v666, %v630
      %v683 = vsub.f32 %v667, %v635
      %v684 = vsub.f32 %v668, %v638
      %v685 = vsub.f32 %v669, %v643
      %v686 = vsub.f32 %v670, %v646
      %v687 = vsub.f32 %v671, %v651
      %v688 = vsub.f32 %v672, %v654
      %v689 = vmul.f32 %v673, 0.1
      %v690 = vmul.f32 %v674, 0.1
      %v691 = vmul.f32 %v675, 0.1
      %v692 = vmul.f32 %v676, 0.1
      %v693 = vmul.f32 %v677, 0.1
      %v694 = vmul.f32 %v678, 0.1
      %v695 = vmul.f32 %v679, 0.1
      %v696 = vmul.f32 %v680, 0.1
      %v697 = vmul.f32 %v681, 0.1
      %v698 = vmul.f32 %v682, 0.1
      %v699 = vmul.f32 %v683, 0.1
      %v700 = vmul.f32 %v684, 0.1
      %v701 = vmul.f32 %v685, 0.1
      %v702 = vmul.f32 %v686, 0.1
      %v703 = vmul.f32 %v687, 0.1
      %v704 = vmul.f32 %v688, 0.1
      %v705 = vadd.f32 %v595, %v689
      %v706 = vadd.f32 %v598, %v690
      %v707 = vadd.f32 %v603, %v691
      %v708 = vadd.f32 %v606, %v692
      %v709 = vadd.f32 %v611, %v693
      %v710 = vadd.f32 %v614, %v694
      %v711 = vadd.f32 %v619, %v695
      %v712 = vadd.f32 %v622, %v696
      %v713 = vadd.f32 %v627, %v697
      %v714 = vadd.f32 %v630, %v698
      %v715 = vadd.f32 %v635, %v699
      %v716 = vadd.f32 %v638, %v700
      %v717 = vadd.f32 %v643, %v701
      %v718 = vadd.f32 %v646, %v702
      %v719 = vadd.f32 %v651, %v703
      %v720 = vadd.f32 %v654, %v704
      %v721 = vpack.c.bf16 %v706, %v705
      %v722 = vpack.c.bf16 %v708, %v707
      %v723 = vpack.c.bf16 %v710, %v709
      %v724 = vpack.c.bf16 %v712, %v711
      %v725 = vpack.c.bf16 %v714, %v713
      %v726 = vpack.c.bf16 %v716, %v715
      %v727 = vpack.c.bf16 %v718, %v717
      %v728 = vpack.c.bf16 %v720, %v719
      %v729 = vld [vmem:[%s258] sm:$0xf]
      %v730 = vld [vmem:[%s258 + $0x4] sm:$0xf]
      %v731 = vld [vmem:[%s258 + $0x8] sm:$0xf]
      %v732 = vld [vmem:[%s258 + $0xc] sm:$0xf]
      %v733 = vld [vmem:[%s258 + $0x10] sm:$0xf]
      %v734 = vld [vmem:[%s258 + $0x14] sm:$0xf]
      %v735 = vld [vmem:[%s258 + $0x18] sm:$0xf]
      %v736 = vld [vmem:[%s258 + $0x1c] sm:$0xf]
      %v737 = vld [vmem:[%s258 + $0x20] sm:$0xf]
      %v738 = vld [vmem:[%s258 + $0x24] sm:$0xf]
      %v739 = vld [vmem:[%s258 + $0x28] sm:$0xf]
      %v740 = vld [vmem:[%s258 + $0x2c] sm:$0xf]
      %v741 = vld [vmem:[%s258 + $0x30] sm:$0xf]
      %v742 = vld [vmem:[%s258 + $0x34] sm:$0xf]
      %v743 = vld [vmem:[%s258 + $0x38] sm:$0xf]
      %v744 = vld [vmem:[%s258 + $0x3c] sm:$0xf]
      %v761 = vunpack.c.l.b16 %v729
      %v762 = vunpack.c.l.b16 %v730
      %v763 = vunpack.c.l.b16 %v731
      %v764 = vunpack.c.l.b16 %v732
      %v765 = vunpack.c.l.b16 %v733
      %v766 = vunpack.c.l.b16 %v734
      %v767 = vunpack.c.l.b16 %v735
      %v768 = vunpack.c.l.b16 %v736
      %v769 = vunpack.c.l.b16 %v737
      %v770 = vunpack.c.l.b16 %v738
      %v771 = vunpack.c.l.b16 %v739
      %v772 = vunpack.c.l.b16 %v740
      %v773 = vunpack.c.l.b16 %v741
      %v774 = vunpack.c.l.b16 %v742
      %v775 = vunpack.c.l.b16 %v743
      %v776 = vunpack.c.l.b16 %v744
      %v777 = vpack.c.b16 %v762, %v761
      %v778 = vpack.c.b16 %v764, %v763
      %v779 = vpack.c.b16 %v766, %v765
      %v780 = vpack.c.b16 %v768, %v767
      %v781 = vpack.c.b16 %v770, %v769
      %v782 = vpack.c.b16 %v772, %v771
      %v783 = vpack.c.b16 %v774, %v773
      %v784 = vpack.c.b16 %v776, %v775
      %793 = vmatprep.subr.bf16.mxu0 0
      %794 = vmatpush1.bf16.msra.mxu0 %v777
      %795 = vmatprep.subr.bf16.mxu0 0
      %796 = vmatpush1.bf16.msra.mxu0 %v778
      %797 = vmatprep.subr.bf16.mxu0 0
      %798 = vmatpush1.bf16.msra.mxu0 %v779
      %799 = vmatprep.subr.bf16.mxu0 0
      %800 = vmatpush1.bf16.msra.mxu0 %v780
      %801 = vmatprep.subr.bf16.mxu0 0
      %802 = vmatpush1.bf16.msra.mxu0 %v781
      %803 = vmatprep.subr.bf16.mxu0 0
      %804 = vmatpush1.bf16.msra.mxu0 %v782
      %805 = vmatprep.subr.bf16.mxu0 0
      %806 = vmatpush1.bf16.msra.mxu0 %v783
      %807 = vmatprep.subr.bf16.mxu0 0
      %808 = vmatpush1.bf16.msra.mxu0 %v784
      %809 = vmatprep.subr.bf16.mxu0 0
      %810 = vmatpush1.bf16.msra.mxu0 0
      %811 = vmatprep.subr.bf16.mxu0 0
      %812 = vmatpush1.bf16.msra.mxu0 0
      %813 = vmatprep.subr.bf16.mxu0 0
      %814 = vmatpush1.bf16.msra.mxu0 0
      %815 = vmatprep.subr.bf16.mxu0 0
      %816 = vmatpush1.bf16.msra.mxu0 0
      %817 = vmatprep.subr.bf16.mxu0 0
      %818 = vmatpush1.bf16.msra.mxu0 0
      %819 = vmatprep.subr.bf16.mxu0 0
      %820 = vmatpush1.bf16.msra.mxu0 0
      %821 = vmatprep.subr.bf16.mxu0 0
      %822 = vmatpush1.bf16.msra.mxu0 0
      %823 = vmatprep.subr.bf16.mxu0 0
      %824 = vmatpush1.bf16.msra.mxu0 0
      %825 = vmatprep.mubr.bf16.mxu0 0
      %826 = vmatmul.mubr.bf16.gmra.mrb[0].mxu0 %v721
      %v827 = vpop.f32.mrb[0].mxu0
      %v828 = vadd.f32 0.0, %v827
      %v829 = vpop.f32.mrb[0].mxu0
      %v830 = vpop.f32.mrb[0].mxu0
      %v831 = vadd.f32 0.0, %v830
      %v832 = vpop.f32.mrb[0].mxu0
      %833 = vmatprep.mubr.bf16.mxu0 0
      %834 = vmatmul.mubr.bf16.gmra.mrb[0].mxu0 %v722
      %v835 = vpop.f32.mrb[0].mxu0
      %v836 = vadd.f32 0.0, %v835
      %v837 = vpop.f32.mrb[0].mxu0
      %v838 = vpop.f32.mrb[0].mxu0
      %v839 = vadd.f32 0.0, %v838
      %v840 = vpop.f32.mrb[0].mxu0
      %841 = vmatprep.mubr.bf16.mxu0 0
      %842 = vmatmul.mubr.bf16.gmra.mrb[0].mxu0 %v723
      %v843 = vpop.f32.mrb[0].mxu0
      %v844 = vadd.f32 0.0, %v843
      %v845 = vpop.f32.mrb[0].mxu0
      %v846 = vpop.f32.mrb[0].mxu0
      %v847 = vadd.f32 0.0, %v846
      %v848 = vpop.f32.mrb[0].mxu0
      %849 = vmatprep.mubr.bf16.mxu0 0
      %850 = vmatmul.mubr.bf16.gmra.mrb[0].mxu0 %v724
      %v851 = vpop.f32.mrb[0].mxu0
      %v852 = vadd.f32 0.0, %v851
      %v853 = vpop.f32.mrb[0].mxu0
      %v854 = vpop.f32.mrb[0].mxu0
      %v855 = vadd.f32 0.0, %v854
      %v856 = vpop.f32.mrb[0].mxu0
      %857 = vmatprep.mubr.bf16.mxu0 0
      %858 = vmatmul.mubr.bf16.gmra.mrb[0].mxu0 %v725
      %v859 = vpop.f32.mrb[0].mxu0
      %v860 = vadd.f32 0.0, %v859
      %v861 = vpop.f32.mrb[0].mxu0
      %v862 = vpop.f32.mrb[0].mxu0
      %v863 = vadd.f32 0.0, %v862
      %v864 = vpop.f32.mrb[0].mxu0
      %865 = vmatprep.mubr.bf16.mxu0 0
      %866 = vmatmul.mubr.bf16.gmra.mrb[0].mxu0 %v726
      %v867 = vpop.f32.mrb[0].mxu0
      %v868 = vadd.f32 0.0, %v867
      %v869 = vpop.f32.mrb[0].mxu0
      %v870 = vpop.f32.mrb[0].mxu0
      %v871 = vadd.f32 0.0, %v870
      %v872 = vpop.f32.mrb[0].mxu0
      %873 = vmatprep.mubr.bf16.mxu0 0
      %874 = vmatmul.mubr.bf16.gmra.mrb[0].mxu0 %v727
      %v875 = vpop.f32.mrb[0].mxu0
      %v876 = vadd.f32 0.0, %v875
      %v877 = vpop.f32.mrb[0].mxu0
      %v878 = vpop.f32.mrb[0].mxu0
      %v879 = vadd.f32 0.0, %v878
      %v880 = vpop.f32.mrb[0].mxu0
      %881 = vmatprep.mubr.bf16.mxu0 0
      %882 = vmatmul.mubr.bf16.gmra.mrb[0].mxu0 %v728
      %v883 = vpop.f32.mrb[0].mxu0
      %v884 = vadd.f32 0.0, %v883
      %v885 = vpop.f32.mrb[0].mxu0
      %v886 = vpop.f32.mrb[0].mxu0
      %v887 = vadd.f32 0.0, %v886
      %v888 = vpop.f32.mrb[0].mxu0
      %889 = vdwg.mxu0
      %v890 = vsub.f32 %v828, %v705
      %v891 = vsub.f32 %v831, %v706
      %v892 = vsub.f32 %v836, %v707
      %v893 = vsub.f32 %v839, %v708
      %v894 = vsub.f32 %v844, %v709
      %v895 = vsub.f32 %v847, %v710
      %v896 = vsub.f32 %v852, %v711
      %v897 = vsub.f32 %v855, %v712
      %v898 = vsub.f32 %v860, %v713
      %v899 = vsub.f32 %v863, %v714
      %v900 = vsub.f32 %v868, %v715
      %v901 = vsub.f32 %v871, %v716
      %v902 = vsub.f32 %v876, %v717
      %v903 = vsub.f32 %v879, %v718
      %v904 = vsub.f32 %v884, %v719
      %v905 = vsub.f32 %v887, %v720
      %v907 = vlaneseq
      %v908 = vshrl.u32 %v907, 7
      %v909 = vsub.s32 0, %v908
      %v910 = vrot.slane %v302, %v909
      %v912 = vmul.f32 %v910, %v890
      %v913 = vmul.f32 %v910, %v891
      %v914 = vmul.f32 %v910, %v892
      %v915 = vmul.f32 %v910, %v893
      %v916 = vmul.f32 %v910, %v894
      %v917 = vmul.f32 %v910, %v895
      %v918 = vmul.f32 %v910, %v896
      %v919 = vmul.f32 %v910, %v897
      %v920 = vmul.f32 %v910, %v898
      %v921 = vmul.f32 %v910, %v899
      %v922 = vmul.f32 %v910, %v900
      %v923 = vmul.f32 %v910, %v901
      %v924 = vmul.f32 %v910, %v902
      %v925 = vmul.f32 %v910, %v903
      %v926 = vmul.f32 %v910, %v904
      %v927 = vmul.f32 %v910, %v905
      %v928 = vadd.f32 %v705, %v912
      %v929 = vadd.f32 %v706, %v913
      %v930 = vadd.f32 %v707, %v914
      %v931 = vadd.f32 %v708, %v915
      %v932 = vadd.f32 %v709, %v916
      %v933 = vadd.f32 %v710, %v917
      %v934 = vadd.f32 %v711, %v918
      %v935 = vadd.f32 %v712, %v919
      %v936 = vadd.f32 %v713, %v920
      %v937 = vadd.f32 %v714, %v921
      %v938 = vadd.f32 %v715, %v922
      %v939 = vadd.f32 %v716, %v923
      %v940 = vadd.f32 %v717, %v924
      %v941 = vadd.f32 %v718, %v925
      %v942 = vadd.f32 %v719, %v926
      %v943 = vadd.f32 %v720, %v927
      %v944 = vld [vmem:[%s261] sm:$0x1]
      %v946 = vlaneseq
      %v947 = vshrl.u32 %v946, 7
      %v948 = vsub.s32 0, %v947
      %v949 = vrot.slane %v944, %v948
      %v951 = vadd.f32 %v928, %v949
      %v952 = vadd.f32 %v929, %v949
      %v953 = vadd.f32 %v930, %v949
      %v954 = vadd.f32 %v931, %v949
      %v955 = vadd.f32 %v932, %v949
      %v956 = vadd.f32 %v933, %v949
      %v957 = vadd.f32 %v934, %v949
      %v958 = vadd.f32 %v935, %v949
      %v959 = vadd.f32 %v936, %v949
      %v960 = vadd.f32 %v937, %v949
      %v961 = vadd.f32 %v938, %v949
      %v962 = vadd.f32 %v939, %v949
      %v963 = vadd.f32 %v940, %v949
      %v964 = vadd.f32 %v941, %v949
      %v965 = vadd.f32 %v942, %v949
      %v966 = vadd.f32 %v943, %v949
      %v967 = vmax.f32 %v951, 0.0
      %v968 = vmax.f32 %v952, 0.0
      %v969 = vmax.f32 %v953, 0.0
      %v970 = vmax.f32 %v954, 0.0
      %v971 = vmax.f32 %v955, 0.0
      %v972 = vmax.f32 %v956, 0.0
      %v973 = vmax.f32 %v957, 0.0
      %v974 = vmax.f32 %v958, 0.0
      %v975 = vmax.f32 %v959, 0.0
      %v976 = vmax.f32 %v960, 0.0
      %v977 = vmax.f32 %v961, 0.0
      %v978 = vmax.f32 %v962, 0.0
      %v979 = vmax.f32 %v963, 0.0
      %v980 = vmax.f32 %v964, 0.0
      %v981 = vmax.f32 %v965, 0.0
      %v982 = vmax.f32 %v966, 0.0
      %983 = vst [vmem:[%s6] sm:$0xff] %v967
      %984 = vst [vmem:[%s6 + $0x8] sm:$0xff] %v968
      %985 = vst [vmem:[%s6 + $0x10] sm:$0xff] %v969
      %986 = vst [vmem:[%s6 + $0x18] sm:$0xff] %v970
      %987 = vst [vmem:[%s6 + $0x20] sm:$0xff] %v971
      %988 = vst [vmem:[%s6 + $0x28] sm:$0xff] %v972
      %989 = vst [vmem:[%s6 + $0x30] sm:$0xff] %v973
      %990 = vst [vmem:[%s6 + $0x38] sm:$0xff] %v974
      %991 = vst [vmem:[%s6 + $0x40] sm:$0xff] %v975
      %992 = vst [vmem:[%s6 + $0x48] sm:$0xff] %v976
      %993 = vst [vmem:[%s6 + $0x50] sm:$0xff] %v977
      %994 = vst [vmem:[%s6 + $0x58] sm:$0xff] %v978
      %995 = vst [vmem:[%s6 + $0x60] sm:$0xff] %v979
      %996 = vst [vmem:[%s6 + $0x68] sm:$0xff] %v980
      %997 = vst [vmem:[%s6 + $0x70] sm:$0xff] %v981
      %998 = vst [vmem:[%s6 + $0x78] sm:$0xff] %v982
      // Predicated region
      $region49: #{hyper_resid_gcn_forward.4} parent=43 // pred_check
        %p999 = pneg %p171
      $region50: #{hyper_resid_gcn_forward.4} parent=43 // pred_check_branch
        %1001 = sbr.rel (%p999) target = $region52
      $region51: #{hyper_resid_gcn_forward.4} parent=43 // pred_region
        _
      $region52: #{hyper_resid_gcn_forward.4} parent=43 // pred_fallthru
        _
      // Predicated region
      $region53: #{hyper_resid_gcn_forward.4} parent=43 // pred_check
        %p1002 = pneg %p171
      $region54: #{hyper_resid_gcn_forward.4} parent=43 // pred_check_branch
        %1004 = sbr.rel (%p1002) target = $region56
      $region55: #{hyper_resid_gcn_forward.4} parent=43 // pred_region
        _
      $region56: #{hyper_resid_gcn_forward.4} parent=43 // pred_fallthru
        _
    $region44: #{hyper_resid_gcn_forward.4} parent=5 // pred_fallthru
      _
    %p1005 = scmp.le.s32.totalorder 2, %s12
    // Predicated region
    $region57: #{hyper_resid_gcn_forward.4} parent=5 // pred_check
      %p1006 = pneg %p1005
    $region58: #{hyper_resid_gcn_forward.4} parent=5 // pred_check_branch
      %1008 = sbr.rel (%p1006) target = $region60
    $region59: #{hyper_resid_gcn_forward.4} parent=5 // pred_region
      %s1009 = ssub.s32 %s12, 2
    $region60: #{hyper_resid_gcn_forward.4} parent=5 // pred_fallthru
      _
  $region6: #{hyper_resid_gcn_forward.4} parent=0 // loop_footer
    %s16 = sadd.s32 1, %s12
  $region7: #{hyper_resid_gcn_forward.4} parent=0 // loop_footer_branch
    %11 = sbr.rel target = $region3
  $region8: #{hyper_resid_gcn_forward.4} parent=0 // loop_exit
    _

</llo_original>
